<compile_context>
chip_gen: v7x
topology: tpu7x:2x2x1
jax: 0.10.0
libtpu: 0.0.40
codegen_flags: <defaults>
</compile_context>

<pallas_src>
import jax
import jax.numpy as jnp
from jax.experimental import pallas as pl
from jax.experimental.pallas import tpu as pltpu

BN_EPS = 1e-5


def mlp_kernel(x_ref, w1_ref, gb_ref, w2_ref, b2_ref, o_ref):
    h_idx = pl.program_id(0)

    @pl.when(h_idx == 0)
    def _init():
        o_ref[...] = jnp.zeros_like(o_ref)

    # ---- Linear 1 (hidden tile): (B, dim)bf16 @ (dim, TH)bf16 -> f32 ----
    # b1 omitted: it cancels exactly in the training-mode BN mean subtraction.
    h = jnp.dot(x_ref[...], w1_ref[...], preferred_element_type=jnp.float32)

    # ---- BatchNorm1d (training mode, biased variance), all in f32 ----
    # Full batch is resident, so per-feature stats over axis 0 are exact.
    mean = jnp.mean(h, axis=0, keepdims=True)                  # (1, TH)
    hc = h - mean
    var = jnp.mean(hc * hc, axis=0, keepdims=True)             # biased variance
    # Fold gamma into the normalization scale: only (1, TH) extra work,
    # removes one full (B, TH) VALU multiply.  rsqrt -> EUP slot.
    scale = gb_ref[0:1, :] * jax.lax.rsqrt(var + BN_EPS)       # (1, TH)
    h = hc * scale + gb_ref[1:2, :]                            # beta

    # ---- ReLU ----
    h = jnp.maximum(h, 0.0)

    # ---- Linear 2 partial: accumulate (B,TH)bf16 @ (TH,proj)bf16 into the ----
    # ---- resident f32 output block.                                       ----
    o_ref[...] += jnp.dot(h.astype(w2_ref.dtype), w2_ref[...],
                          preferred_element_type=jnp.float32)

    @pl.when(h_idx == pl.num_programs(0) - 1)
    def _finalize():
        o_ref[...] += b2_ref[...]


def _vmem_budget_bytes():
    try:
        return int(pltpu.get_tpu_info().vmem_capacity_bytes)
    except Exception:
        return 64 * 1024 * 1024  # conservative: v7x per-core VMEM


def _vmem_estimate_bytes(B, dim, th, proj, single_buffer):
    bf16, f32 = 2, 4
    nconst = 1 if single_buffer else 2            # buffers for constant-index blocks
    return (nconst * B * dim * bf16               # x (resident)
            + 2 * dim * th * bf16                 # w1 tile, double-buffered
            + 2 * 2 * th * f32                    # packed gamma/beta tile
            + 2 * th * proj * bf16                # w2 tile, double-buffered
            + nconst * proj * f32                 # b2
            + nconst * B * proj * f32             # f32 output accumulator block
            + 3 * B * th * f32)                   # compiler-managed (B,TH) f32 temps


def _vmem_limit_bytes(B, dim, th, proj, single_buffer):
    est = int(_vmem_estimate_bytes(B, dim, th, proj, single_buffer) * 1.5) + (2 << 20)
    cap = int(0.9 * _vmem_budget_bytes())         # never above physical VMEM (64 MiB v7x)
    return max(min(est, cap), 8 << 20)


def _pick_tile(B, dim, hidden, proj):
    # Largest lane-aligned tile dividing `hidden` whose working set fits well
    # inside this generation's VMEM (128 MiB v5e/v6e, 64 MiB v7x).  Bigger tiles
    # amortize the ~0.35us/step pipeline overhead; on v5e 256-512 already
    # saturates the 128-wide MXU N dimension, and the budget check naturally
    # caps the choice for large dim/proj.
    budget = int(0.6 * _vmem_budget_bytes())
    for th in (1024, 512, 256, 128):
        if hidden % th == 0 and _vmem_estimate_bytes(B, dim, th, proj, True) <= budget:
            return th
    return hidden


def _spec(block_shape, index_map, *, single_buffer=False):
    """BlockSpec; constant-index blocks can request single buffering."""
    if single_buffer and hasattr(pl, "Buffered"):
        try:
            return pl.BlockSpec(block_shape, index_map,
                                pipeline_mode=pl.Buffered(1))
        except TypeError:   # older BlockSpec without pipeline_mode kwarg
            pass
    return pl.BlockSpec(block_shape, index_map)


def mlp_forward(x, params, th=None, single_buffer=True):
    """x: (B, dim) bf16 (or f32, cast once). params: w1/w2 bf16 stored (in, out);
    b1/b2/gamma/beta f32.  Returns (B, proj) f32."""
    B, dim = x.shape
    hidden = params["w1"].shape[1]
    proj = params["w2"].shape[1]
    if th is None:
        th = _pick_tile(B, dim, hidden, proj)
    assert hidden % th == 0, (hidden, th)
    n_tiles = hidden // th

    # Accept bf16 x upstream to avoid an extra full-array HBM read+write here.
    x_bf16 = x if x.dtype == jnp.bfloat16 else x.astype(jnp.bfloat16)
    # Pack BN affine params -> one per-step DMA stream instead of two.
    # (Production: store pre-packed to skip this tiny host-side concat.)
    gb = jnp.concatenate([params["gamma"], params["beta"]], axis=0)  # (2, hidden) f32

    grid_spec = pltpu.PrefetchScalarGridSpec(
        num_scalar_prefetch=0,
        grid=(n_tiles,),
        in_specs=[
            _spec((B, dim), lambda h: (0, 0), single_buffer=single_buffer),   # x
            # If profiling shows exposed w1 DMA at small per-device B, raise this
            # spec's depth with pipeline_mode=pl.Buffered(3).
            pl.BlockSpec((dim, th), lambda h: (0, h)),                        # w1 tile
            pl.BlockSpec((2, th), lambda h: (0, h)),                          # gamma/beta
            pl.BlockSpec((th, proj), lambda h: (h, 0)),                       # w2 tile
            _spec((1, proj), lambda h: (0, 0), single_buffer=single_buffer),  # b2
        ],
        out_specs=_spec((B, proj), lambda h: (0, 0), single_buffer=single_buffer),
    )

    return pl.pallas_call(
        mlp_kernel,
        out_shape=jax.ShapeDtypeStruct((B, proj), jnp.float32),
        grid_spec=grid_spec,
        compiler_params=pltpu.CompilerParams(
            dimension_semantics=("arbitrary",),          # hidden axis = reduction
            vmem_limit_bytes=_vmem_limit_bytes(B, dim, th, proj, single_buffer),
        ),
    )(x_bf16, params["w1"], gb, params["w2"], params["b2"])


def init_params(key, dim, projection_size, hidden_size):
    """Deterministic synthetic init (PyTorch-like uniform fan_in scaling).

    Weights stored pre-transposed (in_features, out_features) and in bf16 so the
    kernel's weight DMA is halved; biases / BN affine stay f32.  b1 is kept in
    the params (and used by the reference) even though the kernel drops it."""
    k1, k2, k3, k4 = jax.random.split(key, 4)
    lim1 = 1.0 / jnp.sqrt(dim)
    lim2 = 1.0 / jnp.sqrt(hidden_size)
    return {
        "w1": jax.random.uniform(k1, (dim, hidden_size), jnp.float32,
                                 -lim1, lim1).astype(jnp.bfloat16),
        "b1": jax.random.uniform(k2, (1, hidden_size), jnp.float32, -lim1, lim1),
        "gamma": jnp.ones((1, hidden_size), jnp.float32),    # BatchNorm1d weight
        "beta": jnp.zeros((1, hidden_size), jnp.float32),    # BatchNorm1d bias
        "w2": jax.random.uniform(k3, (hidden_size, projection_size), jnp.float32,
                                 -lim2, lim2).astype(jnp.bfloat16),
        "b2": jax.random.uniform(k4, (1, projection_size), jnp.float32, -lim2, lim2),
    }


def mlp_reference(x, params):
    """Pure-JAX reference (same bf16-matmul / f32-accumulate recipe), INCLUDING
    b1 — verifies the kernel's b1-cancellation under training-mode BN."""
    h = jnp.dot(x.astype(jnp.bfloat16), params["w1"],
                preferred_element_type=jnp.float32) + params["b1"]
    mean = jnp.mean(h, axis=0, keepdims=True)
    var = jnp.mean((h - mean) ** 2, axis=0, keepdims=True)
    h = (h - mean) * jax.lax.rsqrt(var + BN_EPS)
    h = h * params["gamma"] + params["beta"]
    h = jnp.maximum(h, 0.0)
    return jnp.dot(h.astype(jnp.bfloat16), params["w2"],
                   preferred_element_type=jnp.float32) + params["b2"]


if __name__ == "__main__":
    # Small, alignment-friendly shapes: B multiple of 16 (bf16 sublane packing),
    # dim/hidden/proj multiples of 128; th=128 => hidden//TH = 2 grid steps so the
    # accumulation path is actually exercised and output stores are lane-dense.
    B, dim, hidden, proj = 16, 128, 256, 128

    key = jax.random.PRNGKey(0)
    kx, kp = jax.random.split(key)
    x = jax.random.normal(kx, (B, dim), jnp.float32).astype(jnp.bfloat16)
    params = init_params(kp, dim, proj, hidden)

    def run(single_buffer):
        return jax.block_until_ready(
            mlp_forward(x, params, th=128, single_buffer=single_buffer))

    try:
        out = run(True)
    except Exception:
        # Fallback if this JAX build rejects pipeline_mode=pl.Buffered(1) on
        # pallas_call BlockSpecs; correctness is unchanged, only VMEM footprint.
        out = run(False)

    ref = mlp_reference(x, params)
    assert out.shape == (B, proj)
    max_diff = jnp.max(jnp.abs(out - ref))
    assert jnp.allclose(out, ref, atol=1e-2, rtol=1e-2), (
        f"mismatch vs reference, max abs diff={max_diff}")

    print("KERNEL_OK")
</pallas_src>

<mosaic_0001>
module attributes {stable_mosaic.version = 11 : i64} {
  func.func @mlp_kernel(%arg0: i32, %arg1: memref<16x128xbf16, #tpu.memory_space<vmem>>, %arg2: memref<128x128xbf16, #tpu.memory_space<vmem>>, %arg3: memref<2x128xf32, #tpu.memory_space<vmem>>, %arg4: memref<128x128xbf16, #tpu.memory_space<vmem>>, %arg5: memref<1x128xf32, #tpu.memory_space<vmem>>, %arg6: memref<16x128xf32, #tpu.memory_space<vmem>>) attributes {dimension_semantics = [#tpu.dimension_semantics<arbitrary>], iteration_bounds = array<i64: 2>, scalar_prefetch = 0 : i64, scratch_operands = 0 : i64, tpu.core_type = #tpu.core_type<tc>, window_params = [{pipeline_mode = #tpu.pipeline_mode<synchronous>, transform_indices = @transform_0, window_bounds = array<i64: 16, 128>}, {transform_indices = @transform_1, window_bounds = array<i64: 128, 128>}, {transform_indices = @transform_2, window_bounds = array<i64: 2, 128>}, {transform_indices = @transform_3, window_bounds = array<i64: 128, 128>}, {pipeline_mode = #tpu.pipeline_mode<synchronous>, transform_indices = @transform_4, window_bounds = array<i64: 1, 128>}, {pipeline_mode = #tpu.pipeline_mode<synchronous>, transform_indices = @transform_5, window_bounds = array<i64: 16, 128>}]} {
    %c0_i32 = arith.constant 0 : i32
    %0 = arith.cmpi eq, %arg0, %c0_i32 : i32
    %1 = arith.extui %0 : i1 to i32
    %c0_i32_0 = arith.constant 0 : i32
    %2 = arith.cmpi ne, %1, %c0_i32_0 : i32
    scf.if %2 {
      %cst_21 = arith.constant 0.000000e+00 : f32
      %38 = vector.broadcast %cst_21 : f32 to vector<16x128xf32>
      %c0_22 = arith.constant 0 : index
      %c0_23 = arith.constant 0 : index
      %39 = vector.load %arg6[%c0_22, %c0_23] : memref<16x128xf32, #tpu.memory_space<vmem>>, vector<16x128xf32>
      tpu.vector_store %arg6[%c0_22, %c0_23], %38 {strides = array<i32>} : memref<16x128xf32, #tpu.memory_space<vmem>>, vector<16x128xf32>,
    } else {
    }
    %c0 = arith.constant 0 : index
    %c0_1 = arith.constant 0 : index
    %3 = vector.load %arg1[%c0, %c0_1] : memref<16x128xbf16, #tpu.memory_space<vmem>>, vector<16x128xbf16>
    %c0_2 = arith.constant 0 : index
    %c0_3 = arith.constant 0 : index
    %4 = vector.load %arg2[%c0_2, %c0_3] : memref<128x128xbf16, #tpu.memory_space<vmem>>, vector<128x128xbf16>
    %cst = arith.constant dense<0.000000e+00> : vector<16x128xf32>
    %5 = tpu.matmul %3, %4, %cst {dimension_numbers = #tpu.dot_dimension_numbers<[1], [0], [0], [1], [0, 0, 1, 1], [], []>} : vector<16x128xbf16>, vector<128x128xbf16>, vector<16x128xf32> -> vector<16x128xf32>
    %cst_4 = arith.constant dense<0.000000e+00> : vector<128xf32>
    %6 = vector.multi_reduction <add>, %5, %cst_4 [0] : vector<16x128xf32> to vector<128xf32>
    %7 = vector.shape_cast %6 : vector<128xf32> to vector<1x128xf32>
    %cst_5 = arith.constant 1.600000e+01 : f32
    %8 = vector.broadcast %cst_5 : f32 to vector<1x128xf32>
    %9 = arith.divf %7, %8 : vector<1x128xf32>
    %10 = vector.broadcast %9 : vector<1x128xf32> to vector<16x128xf32>
    %11 = arith.subf %5, %10 : vector<16x128xf32>
    %12 = arith.mulf %11, %11 : vector<16x128xf32>
    %cst_6 = arith.constant dense<0.000000e+00> : vector<128xf32>
    %13 = vector.multi_reduction <add>, %12, %cst_6 [0] : vector<16x128xf32> to vector<128xf32>
    %14 = vector.shape_cast %13 : vector<128xf32> to vector<1x128xf32>
    %cst_7 = arith.constant 1.600000e+01 : f32
    %15 = vector.broadcast %cst_7 : f32 to vector<1x128xf32>
    %16 = arith.divf %14, %15 : vector<1x128xf32>
    %c0_8 = arith.constant 0 : index
    %c0_9 = arith.constant 0 : index
    %17 = vector.load %arg3[%c0_8, %c0_9] : memref<2x128xf32, #tpu.memory_space<vmem>>, vector<1x128xf32>
    %cst_10 = arith.constant 9.99999974E-6 : f32
    %18 = vector.broadcast %cst_10 : f32 to vector<1x128xf32>
    %19 = arith.addf %16, %18 : vector<1x128xf32>
    %20 = math.rsqrt %19 : vector<1x128xf32>
    %21 = arith.mulf %17, %20 : vector<1x128xf32>
    %22 = vector.broadcast %21 : vector<1x128xf32> to vector<16x128xf32>
    %23 = arith.mulf %11, %22 : vector<16x128xf32>
    %c1 = arith.constant 1 : index
    %c0_11 = arith.constant 0 : index
    %24 = vector.load %arg3[%c1, %c0_11] : memref<2x128xf32, #tpu.memory_space<vmem>>, vector<1x128xf32>
    %25 = vector.broadcast %24 : vector<1x128xf32> to vector<16x128xf32>
    %26 = arith.addf %23, %25 : vector<16x128xf32>
    %cst_12 = arith.constant 0.000000e+00 : f32
    %27 = vector.broadcast %cst_12 : f32 to vector<16x128xf32>
    %28 = arith.maximumf %26, %27 : vector<16x128xf32>
    %c0_13 = arith.constant 0 : index
    %c0_14 = arith.constant 0 : index
    %29 = vector.load %arg6[%c0_13, %c0_14] : memref<16x128xf32, #tpu.memory_space<vmem>>, vector<16x128xf32>
    %30 = arith.truncf %28 : vector<16x128xf32> to vector<16x128xbf16>
    %c0_15 = arith.constant 0 : index
    %c0_16 = arith.constant 0 : index
    %31 = vector.load %arg4[%c0_15, %c0_16] : memref<128x128xbf16, #tpu.memory_space<vmem>>, vector<128x128xbf16>
    %cst_17 = arith.constant dense<0.000000e+00> : vector<16x128xf32>
    %32 = tpu.matmul %30, %31, %cst_17 {dimension_numbers = #tpu.dot_dimension_numbers<[1], [0], [0], [1], [0, 0, 1, 1], [], []>} : vector<16x128xbf16>, vector<128x128xbf16>, vector<16x128xf32> -> vector<16x128xf32>
    %33 = arith.addf %29, %32 : vector<16x128xf32>
    %c0_18 = arith.constant 0 : index
    %c0_19 = arith.constant 0 : index
    %34 = vector.load %arg6[%c0_18, %c0_19] : memref<16x128xf32, #tpu.memory_space<vmem>>, vector<16x128xf32>
    tpu.vector_store %arg6[%c0_18, %c0_19], %33 {strides = array<i32>} : memref<16x128xf32, #tpu.memory_space<vmem>>, vector<16x128xf32>,
    %c1_i32 = arith.constant 1 : i32
    %35 = arith.cmpi eq, %arg0, %c1_i32 : i32
    %36 = arith.extui %35 : i1 to i32
    %c0_i32_20 = arith.constant 0 : i32
    %37 = arith.cmpi ne, %36, %c0_i32_20 : i32
    scf.if %37 {
      %c0_21 = arith.constant 0 : index
      %c0_22 = arith.constant 0 : index
      %38 = vector.load %arg6[%c0_21, %c0_22] : memref<16x128xf32, #tpu.memory_space<vmem>>, vector<16x128xf32>
      %c0_23 = arith.constant 0 : index
      %c0_24 = arith.constant 0 : index
      %39 = vector.load %arg5[%c0_23, %c0_24] : memref<1x128xf32, #tpu.memory_space<vmem>>, vector<1x128xf32>
      %40 = vector.broadcast %39 : vector<1x128xf32> to vector<16x128xf32>
      %41 = arith.addf %38, %40 : vector<16x128xf32>
      %c0_25 = arith.constant 0 : index
      %c0_26 = arith.constant 0 : index
      %42 = vector.load %arg6[%c0_25, %c0_26] : memref<16x128xf32, #tpu.memory_space<vmem>>, vector<16x128xf32>
      tpu.vector_store %arg6[%c0_25, %c0_26], %41 {strides = array<i32>} : memref<16x128xf32, #tpu.memory_space<vmem>>, vector<16x128xf32>,
    } else {
    }
    return
  }
  func.func @transform_0(%arg0: i32) -> (i32, i32) {
    %c0_i32 = arith.constant 0 : i32
    %c0_i32_0 = arith.constant 0 : i32
    %c0_i32_1 = arith.constant 0 : i32
    return %c0_i32, %c0_i32_0 : i32, i32
  }
  func.func @transform_1(%arg0: i32) -> (i32, i32) {
    %c0_i32 = arith.constant 0 : i32
    %c0_i32_0 = arith.constant 0 : i32
    return %c0_i32, %arg0 : i32, i32
  }
  func.func @transform_2(%arg0: i32) -> (i32, i32) {
    %c0_i32 = arith.constant 0 : i32
    %c0_i32_0 = arith.constant 0 : i32
    return %c0_i32, %arg0 : i32, i32
  }
  func.func @transform_3(%arg0: i32) -> (i32, i32) {
    %c0_i32 = arith.constant 0 : i32
    %c0_i32_0 = arith.constant 0 : i32
    return %arg0, %c0_i32 : i32, i32
  }
  func.func @transform_4(%arg0: i32) -> (i32, i32) {
    %c0_i32 = arith.constant 0 : i32
    %c0_i32_0 = arith.constant 0 : i32
    %c0_i32_1 = arith.constant 0 : i32
    return %c0_i32, %c0_i32_0 : i32, i32
  }
  func.func @transform_5(%arg0: i32) -> (i32, i32) {
    %c0_i32 = arith.constant 0 : i32
    %c0_i32_0 = arith.constant 0 : i32
    %c0_i32_1 = arith.constant 0 : i32
    return %c0_i32, %c0_i32_0 : i32, i32
  }
}

module attributes {stable_mosaic.version = 11 : i64} {
  func.func @mlp_kernel(%arg0: i32, %arg1: memref<16x128xbf16, #tpu.memory_space<vmem>>, %arg2: memref<128x128xbf16, #tpu.memory_space<vmem>>, %arg3: memref<2x128xf32, #tpu.memory_space<vmem>>, %arg4: memref<128x128xbf16, #tpu.memory_space<vmem>>, %arg5: memref<1x128xf32, #tpu.memory_space<vmem>>, %arg6: memref<16x128xf32, #tpu.memory_space<vmem>>) attributes {dimension_semantics = [#tpu.dimension_semantics<arbitrary>], iteration_bounds = array<i64: 2>, scalar_prefetch = 0 : i64, scratch_operands = 0 : i64, tpu.core_type = #tpu.core_type<tc>, window_params = [{pipeline_mode = #tpu.pipeline_mode<synchronous>, transform_indices = @transform_0, window_bounds = array<i64: 16, 128>}, {transform_indices = @transform_1, window_bounds = array<i64: 128, 128>}, {transform_indices = @transform_2, window_bounds = array<i64: 2, 128>}, {transform_indices = @transform_3, window_bounds = array<i64: 128, 128>}, {pipeline_mode = #tpu.pipeline_mode<synchronous>, transform_indices = @transform_4, window_bounds = array<i64: 1, 128>}, {pipeline_mode = #tpu.pipeline_mode<synchronous>, transform_indices = @transform_5, window_bounds = array<i64: 16, 128>}]} {
    %c0_i32 = arith.constant 0 : i32
    %0 = arith.cmpi eq, %arg0, %c0_i32 : i32
    %1 = arith.extui %0 : i1 to i32
    %c0_i32_0 = arith.constant 0 : i32
    %2 = arith.cmpi ne, %1, %c0_i32_0 : i32
    scf.if %2 {
      %cst_21 = arith.constant 0.000000e+00 : f32
      %38 = vector.broadcast %cst_21 : f32 to vector<16x128xf32>
      %c0_22 = arith.constant 0 : index
      %c0_23 = arith.constant 0 : index
      %39 = vector.load %arg6[%c0_22, %c0_23] : memref<16x128xf32, #tpu.memory_space<vmem>>, vector<16x128xf32>
      tpu.vector_store %arg6[%c0_22, %c0_23], %38 {strides = array<i32>} : memref<16x128xf32, #tpu.memory_space<vmem>>, vector<16x128xf32>,
    } else {
    }
    %c0 = arith.constant 0 : index
    %c0_1 = arith.constant 0 : index
    %3 = vector.load %arg1[%c0, %c0_1] : memref<16x128xbf16, #tpu.memory_space<vmem>>, vector<16x128xbf16>
    %c0_2 = arith.constant 0 : index
    %c0_3 = arith.constant 0 : index
    %4 = vector.load %arg2[%c0_2, %c0_3] : memref<128x128xbf16, #tpu.memory_space<vmem>>, vector<128x128xbf16>
    %cst = arith.constant dense<0.000000e+00> : vector<16x128xf32>
    %5 = tpu.matmul %3, %4, %cst {dimension_numbers = #tpu.dot_dimension_numbers<[1], [0], [0], [1], [0, 0, 1, 1], [], []>} : vector<16x128xbf16>, vector<128x128xbf16>, vector<16x128xf32> -> vector<16x128xf32>
    %cst_4 = arith.constant dense<0.000000e+00> : vector<128xf32>
    %6 = vector.multi_reduction <add>, %5, %cst_4 [0] : vector<16x128xf32> to vector<128xf32>
    %7 = vector.shape_cast %6 : vector<128xf32> to vector<1x128xf32>
    %cst_5 = arith.constant 1.600000e+01 : f32
    %8 = vector.broadcast %cst_5 : f32 to vector<1x128xf32>
    %9 = arith.divf %7, %8 : vector<1x128xf32>
    %10 = vector.broadcast %9 : vector<1x128xf32> to vector<16x128xf32>
    %11 = arith.subf %5, %10 : vector<16x128xf32>
    %12 = arith.mulf %11, %11 : vector<16x128xf32>
    %cst_6 = arith.constant dense<0.000000e+00> : vector<128xf32>
    %13 = vector.multi_reduction <add>, %12, %cst_6 [0] : vector<16x128xf32> to vector<128xf32>
    %14 = vector.shape_cast %13 : vector<128xf32> to vector<1x128xf32>
    %cst_7 = arith.constant 1.600000e+01 : f32
    %15 = vector.broadcast %cst_7 : f32 to vector<1x128xf32>
    %16 = arith.divf %14, %15 : vector<1x128xf32>
    %c0_8 = arith.constant 0 : index
    %c0_9 = arith.constant 0 : index
    %17 = vector.load %arg3[%c0_8, %c0_9] : memref<2x128xf32, #tpu.memory_space<vmem>>, vector<1x128xf32>
    %cst_10 = arith.constant 9.99999974E-6 : f32
    %18 = vector.broadcast %cst_10 : f32 to vector<1x128xf32>
    %19 = arith.addf %16, %18 : vector<1x128xf32>
    %20 = math.rsqrt %19 : vector<1x128xf32>
    %21 = arith.mulf %17, %20 : vector<1x128xf32>
    %22 = vector.broadcast %21 : vector<1x128xf32> to vector<16x128xf32>
    %23 = arith.mulf %11, %22 : vector<16x128xf32>
    %c1 = arith.constant 1 : index
    %c0_11 = arith.constant 0 : index
    %24 = vector.load %arg3[%c1, %c0_11] : memref<2x128xf32, #tpu.memory_space<vmem>>, vector<1x128xf32>
    %25 = vector.broadcast %24 : vector<1x128xf32> to vector<16x128xf32>
    %26 = arith.addf %23, %25 : vector<16x128xf32>
    %cst_12 = arith.constant 0.000000e+00 : f32
    %27 = vector.broadcast %cst_12 : f32 to vector<16x128xf32>
    %28 = arith.maximumf %26, %27 : vector<16x128xf32>
    %c0_13 = arith.constant 0 : index
    %c0_14 = arith.constant 0 : index
    %29 = vector.load %arg6[%c0_13, %c0_14] : memref<16x128xf32, #tpu.memory_space<vmem>>, vector<16x128xf32>
    %30 = arith.truncf %28 : vector<16x128xf32> to vector<16x128xbf16>
    %c0_15 = arith.constant 0 : index
    %c0_16 = arith.constant 0 : index
    %31 = vector.load %arg4[%c0_15, %c0_16] : memref<128x128xbf16, #tpu.memory_space<vmem>>, vector<128x128xbf16>
    %cst_17 = arith.constant dense<0.000000e+00> : vector<16x128xf32>
    %32 = tpu.matmul %30, %31, %cst_17 {dimension_numbers = #tpu.dot_dimension_numbers<[1], [0], [0], [1], [0, 0, 1, 1], [], []>} : vector<16x128xbf16>, vector<128x128xbf16>, vector<16x128xf32> -> vector<16x128xf32>
    %33 = arith.addf %29, %32 : vector<16x128xf32>
    %c0_18 = arith.constant 0 : index
    %c0_19 = arith.constant 0 : index
    %34 = vector.load %arg6[%c0_18, %c0_19] : memref<16x128xf32, #tpu.memory_space<vmem>>, vector<16x128xf32>
    tpu.vector_store %arg6[%c0_18, %c0_19], %33 {strides = array<i32>} : memref<16x128xf32, #tpu.memory_space<vmem>>, vector<16x128xf32>,
    %c1_i32 = arith.constant 1 : i32
    %35 = arith.cmpi eq, %arg0, %c1_i32 : i32
    %36 = arith.extui %35 : i1 to i32
    %c0_i32_20 = arith.constant 0 : i32
    %37 = arith.cmpi ne, %36, %c0_i32_20 : i32
    scf.if %37 {
      %c0_21 = arith.constant 0 : index
      %c0_22 = arith.constant 0 : index
      %38 = vector.load %arg6[%c0_21, %c0_22] : memref<16x128xf32, #tpu.memory_space<vmem>>, vector<16x128xf32>
      %c0_23 = arith.constant 0 : index
      %c0_24 = arith.constant 0 : index
      %39 = vector.load %arg5[%c0_23, %c0_24] : memref<1x128xf32, #tpu.memory_space<vmem>>, vector<1x128xf32>
      %40 = vector.broadcast %39 : vector<1x128xf32> to vector<16x128xf32>
      %41 = arith.addf %38, %40 : vector<16x128xf32>
      %c0_25 = arith.constant 0 : index
      %c0_26 = arith.constant 0 : index
      %42 = vector.load %arg6[%c0_25, %c0_26] : memref<16x128xf32, #tpu.memory_space<vmem>>, vector<16x128xf32>
      tpu.vector_store %arg6[%c0_25, %c0_26], %41 {strides = array<i32>} : memref<16x128xf32, #tpu.memory_space<vmem>>, vector<16x128xf32>,
    } else {
    }
    return
  }
  func.func @transform_0(%arg0: i32) -> (i32, i32) {
    %c0_i32 = arith.constant 0 : i32
    %c0_i32_0 = arith.constant 0 : i32
    %c0_i32_1 = arith.constant 0 : i32
    return %c0_i32, %c0_i32_0 : i32, i32
  }
  func.func @transform_1(%arg0: i32) -> (i32, i32) {
    %c0_i32 = arith.constant 0 : i32
    %c0_i32_0 = arith.constant 0 : i32
    return %c0_i32, %arg0 : i32, i32
  }
  func.func @transform_2(%arg0: i32) -> (i32, i32) {
    %c0_i32 = arith.constant 0 : i32
    %c0_i32_0 = arith.constant 0 : i32
    return %c0_i32, %arg0 : i32, i32
  }
  func.func @transform_3(%arg0: i32) -> (i32, i32) {
    %c0_i32 = arith.constant 0 : i32
    %c0_i32_0 = arith.constant 0 : i32
    return %arg0, %c0_i32 : i32, i32
  }
  func.func @transform_4(%arg0: i32) -> (i32, i32) {
    %c0_i32 = arith.constant 0 : i32
    %c0_i32_0 = arith.constant 0 : i32
    %c0_i32_1 = arith.constant 0 : i32
    return %c0_i32, %c0_i32_0 : i32, i32
  }
  func.func @transform_5(%arg0: i32) -> (i32, i32) {
    %c0_i32 = arith.constant 0 : i32
    %c0_i32_0 = arith.constant 0 : i32
    %c0_i32_1 = arith.constant 0 : i32
    return %c0_i32, %c0_i32_0 : i32, i32
  }
}

</mosaic_0001>

<llo_original>
// kernel: tpu_custom_call.1
$region0: #{tpu_custom_call.1}
  #allocation0 [shape = 'u32[]', space=smem, size = 0x4, offset = 0x4, fixed_abs, tag = 'smem constant byte address 0x4 - core index']
  #allocation1 [shape = 'u32[144,128]{1,0:T(1,128)}', space=vmem, size = 0x12000, scoped, tag = 'internal scratch']
  %s0 = inlined_call_operand.hbm [shape: bf16[16,128], index: 0, kind: input, shape index: {}]
  %s1 = inlined_call_operand.hbm [shape: bf16[128,256], index: 1, kind: input, shape index: {}]
  %s2 = inlined_call_operand.vmem [shape: f32[2,256], index: 2, kind: input, shape index: {}]
  %s3 = inlined_call_operand.hbm [shape: bf16[256,128], index: 3, kind: input, shape index: {}]
  %s4 = inlined_call_operand.vmem [shape: f32[1,128], index: 4, kind: input, shape index: {}]
  %s5 = inlined_call_operand.hbm [shape: f32[16,128], index: 5, kind: output, shape index: {}]
  %s6 = sld [smem:[#allocation0]]
  $region73: #{tpu_custom_call.1} parent=0
    _
  %s8 = ssub.s32 1, %s6
  %s9 = scalar_select 0, %s8, %s6
  $region1: #{tpu_custom_call.1} parent=0
    #allocation2 [shape = 'u8[4096]{0}', space=vmem, size = 0x1000, scoped, tag = 'input window, operand 0, single buffered']
    #allocation3 [shape = 's32[2]{0}', space=sflag, size = 0x8, scoped, tag = 'scoped memory for tpu_custom_call.1']
    #allocation4 [shape = 's32[2]{0}', space=sflag, size = 0x8, scoped, tag = 'scoped memory for tpu_custom_call.1']
    #allocation5 [shape = 'u8[65536]{0}', space=vmem, size = 0x10000, scoped, tag = 'input window, operand 1']
    #allocation6 [shape = 's32[2]{0}', space=sflag, size = 0x8, scoped, tag = 'scoped memory for tpu_custom_call.1']
    #allocation7 [shape = 'u8[65536]{0}', space=vmem, size = 0x10000, scoped, tag = 'input window, operand 3']
    #allocation8 [shape = 'u8[8192]{0}', space=vmem, size = 0x2000, scoped, tag = 'output window, operand 0, single buffered']
    %10 = vsyncpa [#allocation3], 0
    %11 = vsyncpa [#allocation6], 0
    %s12 = scalar_lea.sflag [#allocation6], 1
    %13 = vsyncpa %s12, 0
    %14 = vsyncpa [#allocation4], 0
    loop: start=0, step=1, limit=4
    $region2: #{tpu_custom_call.1} parent=1 // loop_pre_header
      _
    $region3: #{tpu_custom_call.1} parent=1 // loop_header
      %s16 = sphi 0, %s20
      %p17 = scmp.ge.s32.totalorder %s16, 4
      %s24 = sphi 0, %s24
      %s26 = sphi 0, %s24
      %s27 = sphi 0, %s26
      %s41 = sphi 0, %s27
      %s47 = sphi 0, %s49
      %s50 = sphi 0, %s47
      %s51 = sphi 0, %s50
      %s67 = sphi 0, %s51
      %s73 = sphi 0, %s75
      %s76 = sphi 0, %s73
      %s77 = sphi 0, %s76
      %s93 = sphi 0, %s77
      %s99 = sphi 0, %s101
      %s102 = sphi 0, %s99
      %s103 = sphi 0, %s102
      %s119 = sphi 0, %s103
      %s123 = sphi 0, %s123
      %s125 = sphi 0, %s123
      %s126 = sphi 0, %s125
      %s140 = sphi 0, %s126
      %s144 = sphi 0, %s144
      %s146 = sphi 0, %s144
      %s147 = sphi 0, %s146
      %s161 = sphi 0, %s147
    $region4: #{tpu_custom_call.1} parent=1 // loop_header_branch
      %19 = sbr.rel (%p17) target = $region8
    $region5: #{tpu_custom_call.1} parent=1 // loop_body
      %s21 = ssub.s32 %s16, 1
      %s22 = ssub.s32 %s16, 2
      %s23 = sadd.s32 %s16, 1
      %s25 = sadd.s32 %s24, 1
      %p28 = scmp.eq.s32.totalorder %s16, 1
      %p29 = scmp.ne.s32.totalorder %s24, %s26
      %p30 = scmp.eq.s32.totalorder %s16, 0
      %p31 = por %p29, %p30
      %p32 = scmp.ne.s32.totalorder %s24, %s26
      %p33 = scmp.eq.s32.totalorder %s21, 1
      %p34 = por %p32, %p33
      %p35 = scmp.ne.s32.totalorder %s26, %s27
      %p36 = scmp.eq.s32.totalorder %s21, 0
      %p37 = por %p35, %p36
      %p38 = scmp.ne.s32.totalorder %s26, %s27
      %p39 = scmp.eq.s32.totalorder %s22, 1
      %p40 = por %p38, %p39
      %p42 = scmp.ne.s32.totalorder %s27, %s41
      %p43 = scmp.eq.s32.totalorder %s22, 0
      %p44 = por %p42, %p43
      %s45 = ssub.s32 %s16, %s23
      %p46 = scmp.eq.s32.totalorder %s45, 0
      %s48 = sadd.s32 %s47, 1
      %s49 = scalar_select %p46, %s47, %s48
      %p52 = pneg %p46
      %p53 = scmp.eq.s32.totalorder %s16, 1
      %p54 = por %p52, %p53
      %p55 = scmp.ne.s32.totalorder %s47, %s50
      %p56 = scmp.eq.s32.totalorder %s16, 0
      %p57 = por %p55, %p56
      %p58 = scmp.ne.s32.totalorder %s47, %s50
      %p59 = scmp.eq.s32.totalorder %s21, 1
      %p60 = por %p58, %p59
      %p61 = scmp.ne.s32.totalorder %s50, %s51
      %p62 = scmp.eq.s32.totalorder %s21, 0
      %p63 = por %p61, %p62
      %p64 = scmp.ne.s32.totalorder %s50, %s51
      %p65 = scmp.eq.s32.totalorder %s22, 1
      %p66 = por %p64, %p65
      %p68 = scmp.ne.s32.totalorder %s51, %s67
      %p69 = scmp.eq.s32.totalorder %s22, 0
      %p70 = por %p68, %p69
      %s71 = ssub.s32 %s16, %s23
      %p72 = scmp.eq.s32.totalorder %s71, 0
      %s74 = sadd.s32 %s73, 1
      %s75 = scalar_select %p72, %s73, %s74
      %p78 = pneg %p72
      %p79 = scmp.eq.s32.totalorder %s16, 1
      %p80 = por %p78, %p79
      %p81 = scmp.ne.s32.totalorder %s73, %s76
      %p82 = scmp.eq.s32.totalorder %s16, 0
      %p83 = por %p81, %p82
      %p84 = scmp.ne.s32.totalorder %s73, %s76
      %p85 = scmp.eq.s32.totalorder %s21, 1
      %p86 = por %p84, %p85
      %p87 = scmp.ne.s32.totalorder %s76, %s77
      %p88 = scmp.eq.s32.totalorder %s21, 0
      %p89 = por %p87, %p88
      %p90 = scmp.ne.s32.totalorder %s76, %s77
      %p91 = scmp.eq.s32.totalorder %s22, 1
      %p92 = por %p90, %p91
      %p94 = scmp.ne.s32.totalorder %s77, %s93
      %p95 = scmp.eq.s32.totalorder %s22, 0
      %p96 = por %p94, %p95
      %s97 = ssub.s32 %s16, %s23
      %p98 = scmp.eq.s32.totalorder %s97, 0
      %s100 = sadd.s32 %s99, 1
      %s101 = scalar_select %p98, %s99, %s100
      %p104 = pneg %p98
      %p105 = scmp.eq.s32.totalorder %s16, 1
      %p106 = por %p104, %p105
      %p107 = scmp.ne.s32.totalorder %s99, %s102
      %p108 = scmp.eq.s32.totalorder %s16, 0
      %p109 = por %p107, %p108
      %p110 = scmp.ne.s32.totalorder %s99, %s102
      %p111 = scmp.eq.s32.totalorder %s21, 1
      %p112 = por %p110, %p111
      %p113 = scmp.ne.s32.totalorder %s102, %s103
      %p114 = scmp.eq.s32.totalorder %s21, 0
      %p115 = por %p113, %p114
      %p116 = scmp.ne.s32.totalorder %s102, %s103
      %p117 = scmp.eq.s32.totalorder %s22, 1
      %p118 = por %p116, %p117
      %p120 = scmp.ne.s32.totalorder %s103, %s119
      %p121 = scmp.eq.s32.totalorder %s22, 0
      %p122 = por %p120, %p121
      %s124 = sadd.s32 %s123, 1
      %p127 = scmp.eq.s32.totalorder %s16, 1
      %p128 = scmp.ne.s32.totalorder %s123, %s125
      %p129 = scmp.eq.s32.totalorder %s16, 0
      %p130 = por %p128, %p129
      %p131 = scmp.ne.s32.totalorder %s123, %s125
      %p132 = scmp.eq.s32.totalorder %s21, 1
      %p133 = por %p131, %p132
      %p134 = scmp.ne.s32.totalorder %s125, %s126
      %p135 = scmp.eq.s32.totalorder %s21, 0
      %p136 = por %p134, %p135
      %p137 = scmp.ne.s32.totalorder %s125, %s126
      %p138 = scmp.eq.s32.totalorder %s22, 1
      %p139 = por %p137, %p138
      %p141 = scmp.ne.s32.totalorder %s126, %s140
      %p142 = scmp.eq.s32.totalorder %s22, 0
      %p143 = por %p141, %p142
      %s145 = sadd.s32 %s144, 1
      %p148 = scmp.eq.s32.totalorder %s16, 1
      %p149 = scmp.ne.s32.totalorder %s144, %s146
      %p150 = scmp.eq.s32.totalorder %s16, 0
      %p151 = por %p149, %p150
      %p152 = scmp.ne.s32.totalorder %s144, %s146
      %p153 = scmp.eq.s32.totalorder %s21, 1
      %p154 = por %p152, %p153
      %p155 = scmp.ne.s32.totalorder %s146, %s147
      %p156 = scmp.eq.s32.totalorder %s21, 0
      %p157 = por %p155, %p156
      %p158 = scmp.ne.s32.totalorder %s146, %s147
      %p159 = scmp.eq.s32.totalorder %s22, 1
      %p160 = por %p158, %p159
      %p162 = scmp.ne.s32.totalorder %s147, %s161
      %p163 = scmp.eq.s32.totalorder %s22, 0
      %p164 = por %p162, %p163
      %p165 = scmp.le.s32.totalorder 1, %s16
      %p166 = scmp.lt.s32.totalorder %s16, 3
      %p167 = pnand %p165, %p166
      %p168 = pneg %p167
      // Predicated region
      $region9: #{tpu_custom_call.1} parent=5 // pred_check
        _
      $region10: #{tpu_custom_call.1} parent=5 // pred_check_branch
        %170 = sbr.rel (%p167) target = $region12
      $region11: #{tpu_custom_call.1} parent=5 // pred_region
        %s171 = ssub.s32 %s16, 1
        // Predicated region
        $region13: #{tpu_custom_call.1} parent=11 // pred_check
          %p172 = pneg %p37
        $region14: #{tpu_custom_call.1} parent=11 // pred_check_branch
          %174 = sbr.rel (%p172) target = $region16
        $region15: #{tpu_custom_call.1} parent=11 // pred_region
          %s176 = ssub.s32 128, 128
          %177 = vsyncadd [#allocation3], %s176
          %s178 = sshll.u32 [#allocation2], 4
          %s179 = int_to_ptr.vmem [resolvable:$true] %s178
          %184 = dma.hbm_to_vmem [thread:$0]  %s0, 128, %s179, [#allocation3], 64, 64, 4
        $region16: #{tpu_custom_call.1} parent=11 // pred_fallthru
          _
        // Predicated region
        $region17: #{tpu_custom_call.1} parent=11 // pred_check
          %p185 = pneg %p136
        $region18: #{tpu_custom_call.1} parent=11 // pred_check_branch
          %187 = sbr.rel (%p185) target = $region20
        $region19: #{tpu_custom_call.1} parent=11 // pred_region
          _
        $region20: #{tpu_custom_call.1} parent=11 // pred_fallthru
          _
      $region12: #{tpu_custom_call.1} parent=5 // pred_fallthru
        _
      %p188 = scmp.lt.s32.totalorder %s16, 2
      // Predicated region
      $region21: #{tpu_custom_call.1} parent=5 // pred_check
        %p189 = pneg %p188
      $region22: #{tpu_custom_call.1} parent=5 // pred_check_branch
        %191 = sbr.rel (%p189) target = $region24
      $region23: #{tpu_custom_call.1} parent=5 // pred_region
        // Predicated region
        $region25: #{tpu_custom_call.1} parent=23 // pred_check
          %p192 = pneg %p57
        $region26: #{tpu_custom_call.1} parent=23 // pred_check_branch
          %194 = sbr.rel (%p192) target = $region28
        $region27: #{tpu_custom_call.1} parent=23 // pred_region
          %s195 = sand.u32 %s16, 1
          %s196 = scalar_lea.sflag [#allocation6], %s195
          %s197 = sand.u32 %s47, 1
          %s198 = smul.addr %s197, 64
          %s199 = scalar_lea.vmem [#allocation5], %s198
          %s201 = ssub.s32 1024, 1024
          %202 = vsyncadd %s196, %s201
          %s203 = smul.addr %s16, 64
          %s204 = scalar_lea.hbm %s1, %s203
          %s205 = sshll.u32 %s199, 4
          %s206 = int_to_ptr.vmem [resolvable:$true] %s205
          %211 = dma.hbm_to_vmem [thread:$0]  %s204, 1024, %s206, %s196, 128, 64, 4
        $region28: #{tpu_custom_call.1} parent=23 // pred_fallthru
          _
        // Predicated region
        $region29: #{tpu_custom_call.1} parent=23 // pred_check
          %p212 = pneg %p83
        $region30: #{tpu_custom_call.1} parent=23 // pred_check_branch
          %214 = sbr.rel (%p212) target = $region32
        $region31: #{tpu_custom_call.1} parent=23 // pred_region
          %p215 = scmp.lt.s32.totalorder %s16, 1
          %s216 = scalar_select %p215, %s16, 1
          %s217 = smul.addr %s216, 2
          %s218 = scalar_lea.vmem %s2, %s217
        $region32: #{tpu_custom_call.1} parent=23 // pred_fallthru
          _
        // Predicated region
        $region33: #{tpu_custom_call.1} parent=23 // pred_check
          %p219 = pneg %p109
        $region34: #{tpu_custom_call.1} parent=23 // pred_check_branch
          %221 = sbr.rel (%p219) target = $region36
        $region35: #{tpu_custom_call.1} parent=23 // pred_region
          %s222 = sand.u32 %s16, 1
          %s223 = scalar_lea.sflag [#allocation6], %s222
          %s224 = sand.u32 %s99, 1
          %s225 = smul.addr %s224, 64
          %s226 = scalar_lea.vmem [#allocation7], %s225
          %s227 = smul.u32 16, %s16
          %s229 = ssub.s32 1024, 1024
          %230 = vsyncadd %s223, %s229
          %s231 = smul.addr %s227, 64
          %s232 = scalar_lea.hbm %s3, %s231
          %s233 = sshll.u32 %s226, 4
          %s234 = int_to_ptr.vmem [resolvable:$true] %s233
          %239 = dma.hbm_to_vmem [thread:$0]  %s232, 1024, %s234, %s223, 64, 64, 4
        $region36: #{tpu_custom_call.1} parent=23 // pred_fallthru
          _
      $region24: #{tpu_custom_call.1} parent=5 // pred_fallthru
        _
      %p240 = scmp.le.s32.totalorder 1, %s16
      %p241 = scmp.lt.s32.totalorder %s16, 3
      %p242 = pnand %p240, %p241
      %p243 = pneg %p242
      // Predicated region
      $region37: #{tpu_custom_call.1} parent=5 // pred_check
        _
      $region38: #{tpu_custom_call.1} parent=5 // pred_check_branch
        %245 = sbr.rel (%p242) target = $region40
      $region39: #{tpu_custom_call.1} parent=5 // pred_region
        %s246 = ssub.s32 %s16, 1
        // Predicated region
        $region41: #{tpu_custom_call.1} parent=39 // pred_check
          %p247 = pneg %p37
        $region42: #{tpu_custom_call.1} parent=39 // pred_check_branch
          %249 = sbr.rel (%p247) target = $region44
        $region43: #{tpu_custom_call.1} parent=39 // pred_region
          %250 = dma.done [#allocation3], 128
        $region44: #{tpu_custom_call.1} parent=39 // pred_fallthru
          _
        %s251 = sand.u32 %s21, 1
        %s252 = scalar_lea.sflag [#allocation6], %s251
        %s253 = sand.u32 %s50, 1
        %s254 = smul.addr %s253, 64
        %s255 = scalar_lea.vmem [#allocation5], %s254
        // Predicated region
        $region45: #{tpu_custom_call.1} parent=39 // pred_check
          %p256 = pneg %p63
        $region46: #{tpu_custom_call.1} parent=39 // pred_check_branch
          %258 = sbr.rel (%p256) target = $region48
        $region47: #{tpu_custom_call.1} parent=39 // pred_region
          %259 = dma.done %s252, 1024
        $region48: #{tpu_custom_call.1} parent=39 // pred_fallthru
          _
        %s260 = sand.u32 %s21, 1
        %s261 = scalar_lea.sflag [#allocation6], %s260
        %s262 = sand.u32 %s102, 1
        %s263 = smul.addr %s262, 64
        %s264 = scalar_lea.vmem [#allocation7], %s263
        // Predicated region
        $region49: #{tpu_custom_call.1} parent=39 // pred_check
          %p265 = pneg %p115
        $region50: #{tpu_custom_call.1} parent=39 // pred_check_branch
          %267 = sbr.rel (%p265) target = $region52
        $region51: #{tpu_custom_call.1} parent=39 // pred_region
          %268 = dma.done %s261, 1024
        $region52: #{tpu_custom_call.1} parent=39 // pred_fallthru
          _
        %p269 = pneg %p37
        %p270 = pneg %p34
        %s271 = sand.u32 %s21, 1
        %s272 = scalar_lea.sflag [#allocation6], %s271
        %s273 = sand.u32 %s50, 1
        %s274 = smul.addr %s273, 64
        %s275 = scalar_lea.vmem [#allocation5], %s274
        %p276 = pneg %p63
        %p277 = pneg %p60
        %p278 = scmp.lt.s32.totalorder %s21, 1
        %s279 = scalar_select %p278, %s21, 1
        %s280 = smul.addr %s279, 2
        %s281 = scalar_lea.vmem %s2, %s280
        %p282 = pneg %p89
        %p283 = pneg %p86
        %s284 = sand.u32 %s21, 1
        %s285 = scalar_lea.sflag [#allocation6], %s284
        %s286 = sand.u32 %s102, 1
        %s287 = smul.addr %s286, 64
        %s288 = scalar_lea.vmem [#allocation7], %s287
        %p289 = pneg %p115
        %p290 = pneg %p112
        %p291 = pneg %p136
        %p292 = pneg %p133
        %p293 = pneg %p157
        %p294 = pneg %p154
        %p295 = scmp.lt.s32.totalorder %s21, 1
        %s296 = scalar_select %p295, %s21, 1
        %s297 = smul.addr %s296, 2
        %s298 = scalar_lea.vmem %s2, %s297
        %s299 = smul.u32 16, %s21
        %p301 = scmp.eq.s32.totalorder %s21, 0
        // Predicated region
        $region53: #{tpu_custom_call.1} parent=39 // pred_check
          %p302 = pneg %p301
        $region54: #{tpu_custom_call.1} parent=39 // pred_check_branch
          %304 = sbr.rel (%p302) target = $region56
        $region55: #{tpu_custom_call.1} parent=39 // pred_region
          %305 = vst [vmem:[#allocation8] sm:$0xff] 0.0
          %306 = vst [vmem:[#allocation8 + $0x8] sm:$0xff] 0.0
        $region56: #{tpu_custom_call.1} parent=39 // pred_fallthru
          _
        %v307 = vld [vmem:[#allocation2] sm:$0xf]
        %v308 = vld [vmem:[#allocation2 + $0x4] sm:$0xf]
        %v309 = vld [vmem:[%s255] sm:$0xf]
        %v310 = vld [vmem:[%s255 + $0x4] sm:$0xf]
        %v311 = vld [vmem:[%s255 + $0x8] sm:$0xf]
        %v312 = vld [vmem:[%s255 + $0xc] sm:$0xf]
        %v313 = vld [vmem:[%s255 + $0x10] sm:$0xf]
        %v314 = vld [vmem:[%s255 + $0x14] sm:$0xf]
        %v315 = vld [vmem:[%s255 + $0x18] sm:$0xf]
        %v316 = vld [vmem:[%s255 + $0x1c] sm:$0xf]
        %v317 = vld [vmem:[%s255 + $0x20] sm:$0xf]
        %v318 = vld [vmem:[%s255 + $0x24] sm:$0xf]
        %v319 = vld [vmem:[%s255 + $0x28] sm:$0xf]
        %v320 = vld [vmem:[%s255 + $0x2c] sm:$0xf]
        %v321 = vld [vmem:[%s255 + $0x30] sm:$0xf]
        %v322 = vld [vmem:[%s255 + $0x34] sm:$0xf]
        %v323 = vld [vmem:[%s255 + $0x38] sm:$0xf]
        %v324 = vld [vmem:[%s255 + $0x3c] sm:$0xf]
        %v327 = vunpack.c.l.b16 %v307
        %v328 = vunpack.c.l.b16 %v308
        %v329 = vpack.c.b16 %v328, %v327
        %v347 = vunpack.c.l.b16 %v309
        %v348 = vunpack.c.l.b16 %v310
        %v349 = vunpack.c.l.b16 %v311
        %v350 = vunpack.c.l.b16 %v312
        %v351 = vunpack.c.l.b16 %v313
        %v352 = vunpack.c.l.b16 %v314
        %v353 = vunpack.c.l.b16 %v315
        %v354 = vunpack.c.l.b16 %v316
        %v355 = vunpack.c.l.b16 %v317
        %v356 = vunpack.c.l.b16 %v318
        %v357 = vunpack.c.l.b16 %v319
        %v358 = vunpack.c.l.b16 %v320
        %v359 = vunpack.c.l.b16 %v321
        %v360 = vunpack.c.l.b16 %v322
        %v361 = vunpack.c.l.b16 %v323
        %v362 = vunpack.c.l.b16 %v324
        %v363 = vpack.c.b16 %v348, %v347
        %v364 = vpack.c.b16 %v350, %v349
        %v365 = vpack.c.b16 %v352, %v351
        %v366 = vpack.c.b16 %v354, %v353
        %v367 = vpack.c.b16 %v356, %v355
        %v368 = vpack.c.b16 %v358, %v357
        %v369 = vpack.c.b16 %v360, %v359
        %v370 = vpack.c.b16 %v362, %v361
        %379 = vmatprep.subr.bf16.mxu0 0
        %380 = vmatpush1.bf16.msra.mxu0 %v363
        %381 = vmatprep.subr.bf16.mxu0 0
        %382 = vmatpush1.bf16.msra.mxu0 %v364
        %383 = vmatprep.subr.bf16.mxu0 0
        %384 = vmatpush1.bf16.msra.mxu0 %v365
        %385 = vmatprep.subr.bf16.mxu0 0
        %386 = vmatpush1.bf16.msra.mxu0 %v366
        %387 = vmatprep.subr.bf16.mxu0 0
        %388 = vmatpush1.bf16.msra.mxu0 %v367
        %389 = vmatprep.subr.bf16.mxu0 0
        %390 = vmatpush1.bf16.msra.mxu0 %v368
        %391 = vmatprep.subr.bf16.mxu0 0
        %392 = vmatpush1.bf16.msra.mxu0 %v369
        %393 = vmatprep.subr.bf16.mxu0 0
        %394 = vmatpush1.bf16.msra.mxu0 %v370
        %395 = vmatprep.subr.bf16.mxu0 0
        %396 = vmatpush1.bf16.msra.mxu0 0
        %397 = vmatprep.subr.bf16.mxu0 0
        %398 = vmatpush1.bf16.msra.mxu0 0
        %399 = vmatprep.subr.bf16.mxu0 0
        %400 = vmatpush1.bf16.msra.mxu0 0
        %401 = vmatprep.subr.bf16.mxu0 0
        %402 = vmatpush1.bf16.msra.mxu0 0
        %403 = vmatprep.subr.bf16.mxu0 0
        %404 = vmatpush1.bf16.msra.mxu0 0
        %405 = vmatprep.subr.bf16.mxu0 0
        %406 = vmatpush1.bf16.msra.mxu0 0
        %407 = vmatprep.subr.bf16.mxu0 0
        %408 = vmatpush1.bf16.msra.mxu0 0
        %409 = vmatprep.subr.bf16.mxu0 0
        %410 = vmatpush1.bf16.msra.mxu0 0
        %411 = vmatprep.mubr.bf16.mxu0 0
        %412 = vmatmul.mubr.bf16.gmra.mrb[0].mxu0 %v329
        %v413 = vpop.f32.mrb[0].mxu0
        %v414 = vadd.f32 0.0, %v413
        %v415 = vpop.f32.mrb[0].mxu0
        %v416 = vpop.f32.mrb[0].mxu0
        %v417 = vadd.f32 0.0, %v416
        %v418 = vpop.f32.mrb[0].mxu0
        %419 = vdwg.mxu0
        %v420 = vadd.f32 %v414, %v417
        %v421 = vrot.slane %v420, 4
        %v422 = vadd.f32 %v420, %v421
        %v423 = vrot.slane %v422, 2
        %v424 = vadd.f32 %v422, %v423
        %v425 = vrot.slane %v424, 1
        %v426 = vadd.f32 %v424, %v425
        %v427 = vrcp.pop 16.0
        %v428 = vmul.f32 %v426, %v427
        %v429 = vsub.f32 %v414, %v428
        %v430 = vsub.f32 %v417, %v428
        %v431 = vmul.f32 %v429, %v429
        %v432 = vmul.f32 %v430, %v430
        %v433 = vadd.f32 %v431, %v432
        %v434 = vrot.slane %v433, 4
        %v435 = vadd.f32 %v433, %v434
        %v436 = vrot.slane %v435, 2
        %v437 = vadd.f32 %v435, %v436
        %v438 = vrot.slane %v437, 1
        %v439 = vadd.f32 %v437, %v438
        %v440 = vmul.f32 %v439, %v427
        %v441 = vld [vmem:[%s298] sm:$0x1]
        %v442 = vadd.f32 %v440, 1e-05
        %v443 = vrsqrt.pop %v442
        %v444 = vmul.f32 %v441, %v443
        %v445 = vlaneseq
        %v446 = vshrl.u32 %v445, 7
        %v447 = vsub.s32 0, %v446
        %v448 = vrot.slane %v444, %v447
        %v449 = vmul.f32 %v429, %v448
        %v450 = vmul.f32 %v430, %v448
        %v451 = vld [vmem:[%s298 + $0x1] sm:$0x1]
        %v452 = vlaneseq
        %v453 = vshrl.u32 %v452, 7
        %v454 = vsub.s32 0, %v453
        %v455 = vrot.slane %v451, %v454
        %v456 = vadd.f32 %v449, %v455
        %v457 = vadd.f32 %v450, %v455
        %v458 = vmax.f32 %v456, 0.0
        %v459 = vmax.f32 %v457, 0.0
        %v460 = vld [vmem:[#allocation8] sm:$0xff]
        %v461 = vld [vmem:[#allocation8 + $0x8] sm:$0xff]
        %v462 = vpack.c.bf16 %v459, %v458
        %v463 = vld [vmem:[%s264] sm:$0xf]
        %v464 = vld [vmem:[%s264 + $0x4] sm:$0xf]
        %v465 = vld [vmem:[%s264 + $0x8] sm:$0xf]
        %v466 = vld [vmem:[%s264 + $0xc] sm:$0xf]
        %v467 = vld [vmem:[%s264 + $0x10] sm:$0xf]
        %v468 = vld [vmem:[%s264 + $0x14] sm:$0xf]
        %v469 = vld [vmem:[%s264 + $0x18] sm:$0xf]
        %v470 = vld [vmem:[%s264 + $0x1c] sm:$0xf]
        %v471 = vld [vmem:[%s264 + $0x20] sm:$0xf]
        %v472 = vld [vmem:[%s264 + $0x24] sm:$0xf]
        %v473 = vld [vmem:[%s264 + $0x28] sm:$0xf]
        %v474 = vld [vmem:[%s264 + $0x2c] sm:$0xf]
        %v475 = vld [vmem:[%s264 + $0x30] sm:$0xf]
        %v476 = vld [vmem:[%s264 + $0x34] sm:$0xf]
        %v477 = vld [vmem:[%s264 + $0x38] sm:$0xf]
        %v478 = vld [vmem:[%s264 + $0x3c] sm:$0xf]
        %v495 = vunpack.c.l.b16 %v463
        %v496 = vunpack.c.l.b16 %v464
        %v497 = vunpack.c.l.b16 %v465
        %v498 = vunpack.c.l.b16 %v466
        %v499 = vunpack.c.l.b16 %v467
        %v500 = vunpack.c.l.b16 %v468
        %v501 = vunpack.c.l.b16 %v469
        %v502 = vunpack.c.l.b16 %v470
        %v503 = vunpack.c.l.b16 %v471
        %v504 = vunpack.c.l.b16 %v472
        %v505 = vunpack.c.l.b16 %v473
        %v506 = vunpack.c.l.b16 %v474
        %v507 = vunpack.c.l.b16 %v475
        %v508 = vunpack.c.l.b16 %v476
        %v509 = vunpack.c.l.b16 %v477
        %v510 = vunpack.c.l.b16 %v478
        %v511 = vpack.c.b16 %v496, %v495
        %v512 = vpack.c.b16 %v498, %v497
        %v513 = vpack.c.b16 %v500, %v499
        %v514 = vpack.c.b16 %v502, %v501
        %v515 = vpack.c.b16 %v504, %v503
        %v516 = vpack.c.b16 %v506, %v505
        %v517 = vpack.c.b16 %v508, %v507
        %v518 = vpack.c.b16 %v510, %v509
        %527 = vmatprep.subr.bf16.mxu0 0
        %528 = vmatpush1.bf16.msra.mxu0 %v511
        %529 = vmatprep.subr.bf16.mxu0 0
        %530 = vmatpush1.bf16.msra.mxu0 %v512
        %531 = vmatprep.subr.bf16.mxu0 0
        %532 = vmatpush1.bf16.msra.mxu0 %v513
        %533 = vmatprep.subr.bf16.mxu0 0
        %534 = vmatpush1.bf16.msra.mxu0 %v514
        %535 = vmatprep.subr.bf16.mxu0 0
        %536 = vmatpush1.bf16.msra.mxu0 %v515
        %537 = vmatprep.subr.bf16.mxu0 0
        %538 = vmatpush1.bf16.msra.mxu0 %v516
        %539 = vmatprep.subr.bf16.mxu0 0
        %540 = vmatpush1.bf16.msra.mxu0 %v517
        %541 = vmatprep.subr.bf16.mxu0 0
        %542 = vmatpush1.bf16.msra.mxu0 %v518
        %543 = vmatprep.subr.bf16.mxu0 0
        %544 = vmatpush1.bf16.msra.mxu0 0
        %545 = vmatprep.subr.bf16.mxu0 0
        %546 = vmatpush1.bf16.msra.mxu0 0
        %547 = vmatprep.subr.bf16.mxu0 0
        %548 = vmatpush1.bf16.msra.mxu0 0
        %549 = vmatprep.subr.bf16.mxu0 0
        %550 = vmatpush1.bf16.msra.mxu0 0
        %551 = vmatprep.subr.bf16.mxu0 0
        %552 = vmatpush1.bf16.msra.mxu0 0
        %553 = vmatprep.subr.bf16.mxu0 0
        %554 = vmatpush1.bf16.msra.mxu0 0
        %555 = vmatprep.subr.bf16.mxu0 0
        %556 = vmatpush1.bf16.msra.mxu0 0
        %557 = vmatprep.subr.bf16.mxu0 0
        %558 = vmatpush1.bf16.msra.mxu0 0
        %559 = vmatprep.mubr.bf16.mxu0 0
        %560 = vmatmul.mubr.bf16.gmra.mrb[0].mxu0 %v462
        %v561 = vpop.f32.mrb[0].mxu0
        %v562 = vadd.f32 0.0, %v561
        %v563 = vpop.f32.mrb[0].mxu0
        %v564 = vpop.f32.mrb[0].mxu0
        %v565 = vadd.f32 0.0, %v564
        %v566 = vpop.f32.mrb[0].mxu0
        %567 = vdwg.mxu0
        %v568 = vadd.f32 %v460, %v562
        %v569 = vadd.f32 %v461, %v565
        %570 = vst [vmem:[#allocation8] sm:$0xff] %v568
        %571 = vst [vmem:[#allocation8 + $0x8] sm:$0xff] %v569
        %p572 = scmp.eq.s32.totalorder %s21, 1
        // Predicated region
        $region57: #{tpu_custom_call.1} parent=39 // pred_check
          %p573 = pneg %p572
        $region58: #{tpu_custom_call.1} parent=39 // pred_check_branch
          %575 = sbr.rel (%p573) target = $region60
        $region59: #{tpu_custom_call.1} parent=39 // pred_region
          %v576 = vld [vmem:[#allocation8] sm:$0xff]
          %v577 = vld [vmem:[#allocation8 + $0x8] sm:$0xff]
          %v578 = vld [vmem:[%s4] sm:$0x1]
          %v580 = vlaneseq
          %v581 = vshrl.u32 %v580, 7
          %v582 = vsub.s32 0, %v581
          %v583 = vrot.slane %v578, %v582
          %v585 = vadd.f32 %v576, %v583
          %v586 = vadd.f32 %v577, %v583
          %587 = vst [vmem:[#allocation8] sm:$0xff] %v585
          %588 = vst [vmem:[#allocation8 + $0x8] sm:$0xff] %v586
        $region60: #{tpu_custom_call.1} parent=39 // pred_fallthru
          _
        // Predicated region
        $region61: #{tpu_custom_call.1} parent=39 // pred_check
          %p589 = pneg %p154
        $region62: #{tpu_custom_call.1} parent=39 // pred_check_branch
          %591 = sbr.rel (%p589) target = $region64
        $region63: #{tpu_custom_call.1} parent=39 // pred_region
          %s593 = ssub.s32 256, 256
          %594 = vsyncadd [#allocation4], %s593
          %s595 = sshll.u32 [#allocation8], 4
          %s596 = int_to_ptr.vmem [resolvable:$true] %s595
          %601 = dma.vmem_to_hbm [thread:$0]  %s596, 256, %s5, [#allocation4], 128, 128, 8
        $region64: #{tpu_custom_call.1} parent=39 // pred_fallthru
          _
        // Predicated region
        $region65: #{tpu_custom_call.1} parent=39 // pred_check
          %p602 = pneg %p154
        $region66: #{tpu_custom_call.1} parent=39 // pred_check_branch
          %604 = sbr.rel (%p602) target = $region68
        $region67: #{tpu_custom_call.1} parent=39 // pred_region
          %605 = dma.done [#allocation4], 256
        $region68: #{tpu_custom_call.1} parent=39 // pred_fallthru
          _
      $region40: #{tpu_custom_call.1} parent=5 // pred_fallthru
        _
      %p606 = scmp.le.s32.totalorder 2, %s16
      // Predicated region
      $region69: #{tpu_custom_call.1} parent=5 // pred_check
        %p607 = pneg %p606
      $region70: #{tpu_custom_call.1} parent=5 // pred_check_branch
        %609 = sbr.rel (%p607) target = $region72
      $region71: #{tpu_custom_call.1} parent=5 // pred_region
        %s610 = ssub.s32 %s16, 2
      $region72: #{tpu_custom_call.1} parent=5 // pred_fallthru
        _
    $region6: #{tpu_custom_call.1} parent=1 // loop_footer
      %s20 = sadd.s32 1, %s16
    $region7: #{tpu_custom_call.1} parent=1 // loop_footer_branch
      %15 = sbr.rel target = $region3
    $region8: #{tpu_custom_call.1} parent=1 // loop_exit
      _
    %611 = vsyncpa [#allocation3], 1
    %s612 = scalar_lea.sflag [#allocation3], 1
    %613 = vsyncpa %s612, 1
    %614 = vsyncpa [#allocation6], 1
    %s615 = scalar_lea.sflag [#allocation6], 1
    %616 = vsyncpa %s615, 1
    %617 = vsyncpa [#allocation4], 1
    %s618 = scalar_lea.sflag [#allocation4], 1
    %619 = vsyncpa %s618, 1

// kernel: tpu_custom_call.1
$region0: #{tpu_custom_call.1}
  #allocation0 [shape = 'u32[]', space=smem, size = 0x4, offset = 0x4, fixed_abs, tag = 'smem constant byte address 0x4 - core index']
  #allocation1 [shape = 'u32[144,128]{1,0:T(1,128)}', space=vmem, size = 0x12000, scoped, tag = 'internal scratch']
  %s0 = inlined_call_operand.hbm [shape: bf16[16,128], index: 0, kind: input, shape index: {}]
  %s1 = inlined_call_operand.hbm [shape: bf16[128,256], index: 1, kind: input, shape index: {}]
  %s2 = inlined_call_operand.vmem [shape: f32[2,256], index: 2, kind: input, shape index: {}]
  %s3 = inlined_call_operand.hbm [shape: bf16[256,128], index: 3, kind: input, shape index: {}]
  %s4 = inlined_call_operand.vmem [shape: f32[1,128], index: 4, kind: input, shape index: {}]
  %s5 = inlined_call_operand.hbm [shape: f32[16,128], index: 5, kind: output, shape index: {}]
  %s6 = sld [smem:[#allocation0]]
  $region73: #{tpu_custom_call.1} parent=0
    _
  %s8 = ssub.s32 1, %s6
  %s9 = scalar_select 0, %s8, %s6
  $region1: #{tpu_custom_call.1} parent=0
    #allocation2 [shape = 'u8[4096]{0}', space=vmem, size = 0x1000, scoped, tag = 'input window, operand 0, single buffered']
    #allocation3 [shape = 's32[2]{0}', space=sflag, size = 0x8, scoped, tag = 'scoped memory for tpu_custom_call.1']
    #allocation4 [shape = 's32[2]{0}', space=sflag, size = 0x8, scoped, tag = 'scoped memory for tpu_custom_call.1']
    #allocation5 [shape = 'u8[65536]{0}', space=vmem, size = 0x10000, scoped, tag = 'input window, operand 1']
    #allocation6 [shape = 's32[2]{0}', space=sflag, size = 0x8, scoped, tag = 'scoped memory for tpu_custom_call.1']
    #allocation7 [shape = 'u8[65536]{0}', space=vmem, size = 0x10000, scoped, tag = 'input window, operand 3']
    #allocation8 [shape = 'u8[8192]{0}', space=vmem, size = 0x2000, scoped, tag = 'output window, operand 0, single buffered']
    %10 = vsyncpa [#allocation3], 0
    %11 = vsyncpa [#allocation6], 0
    %s12 = scalar_lea.sflag [#allocation6], 1
    %13 = vsyncpa %s12, 0
    %14 = vsyncpa [#allocation4], 0
    loop: start=0, step=1, limit=4
    $region2: #{tpu_custom_call.1} parent=1 // loop_pre_header
      _
    $region3: #{tpu_custom_call.1} parent=1 // loop_header
      %s16 = sphi 0, %s20
      %p17 = scmp.ge.s32.totalorder %s16, 4
      %s24 = sphi 0, %s24
      %s26 = sphi 0, %s24
      %s27 = sphi 0, %s26
      %s41 = sphi 0, %s27
      %s47 = sphi 0, %s49
      %s50 = sphi 0, %s47
      %s51 = sphi 0, %s50
      %s67 = sphi 0, %s51
      %s73 = sphi 0, %s75
      %s76 = sphi 0, %s73
      %s77 = sphi 0, %s76
      %s93 = sphi 0, %s77
      %s99 = sphi 0, %s101
      %s102 = sphi 0, %s99
      %s103 = sphi 0, %s102
      %s119 = sphi 0, %s103
      %s123 = sphi 0, %s123
      %s125 = sphi 0, %s123
      %s126 = sphi 0, %s125
      %s140 = sphi 0, %s126
      %s144 = sphi 0, %s144
      %s146 = sphi 0, %s144
      %s147 = sphi 0, %s146
      %s161 = sphi 0, %s147
    $region4: #{tpu_custom_call.1} parent=1 // loop_header_branch
      %19 = sbr.rel (%p17) target = $region8
    $region5: #{tpu_custom_call.1} parent=1 // loop_body
      %s21 = ssub.s32 %s16, 1
      %s22 = ssub.s32 %s16, 2
      %s23 = sadd.s32 %s16, 1
      %s25 = sadd.s32 %s24, 1
      %p28 = scmp.eq.s32.totalorder %s16, 1
      %p29 = scmp.ne.s32.totalorder %s24, %s26
      %p30 = scmp.eq.s32.totalorder %s16, 0
      %p31 = por %p29, %p30
      %p32 = scmp.ne.s32.totalorder %s24, %s26
      %p33 = scmp.eq.s32.totalorder %s21, 1
      %p34 = por %p32, %p33
      %p35 = scmp.ne.s32.totalorder %s26, %s27
      %p36 = scmp.eq.s32.totalorder %s21, 0
      %p37 = por %p35, %p36
      %p38 = scmp.ne.s32.totalorder %s26, %s27
      %p39 = scmp.eq.s32.totalorder %s22, 1
      %p40 = por %p38, %p39
      %p42 = scmp.ne.s32.totalorder %s27, %s41
      %p43 = scmp.eq.s32.totalorder %s22, 0
      %p44 = por %p42, %p43
      %s45 = ssub.s32 %s16, %s23
      %p46 = scmp.eq.s32.totalorder %s45, 0
      %s48 = sadd.s32 %s47, 1
      %s49 = scalar_select %p46, %s47, %s48
      %p52 = pneg %p46
      %p53 = scmp.eq.s32.totalorder %s16, 1
      %p54 = por %p52, %p53
      %p55 = scmp.ne.s32.totalorder %s47, %s50
      %p56 = scmp.eq.s32.totalorder %s16, 0
      %p57 = por %p55, %p56
      %p58 = scmp.ne.s32.totalorder %s47, %s50
      %p59 = scmp.eq.s32.totalorder %s21, 1
      %p60 = por %p58, %p59
      %p61 = scmp.ne.s32.totalorder %s50, %s51
      %p62 = scmp.eq.s32.totalorder %s21, 0
      %p63 = por %p61, %p62
      %p64 = scmp.ne.s32.totalorder %s50, %s51
      %p65 = scmp.eq.s32.totalorder %s22, 1
      %p66 = por %p64, %p65
      %p68 = scmp.ne.s32.totalorder %s51, %s67
      %p69 = scmp.eq.s32.totalorder %s22, 0
      %p70 = por %p68, %p69
      %s71 = ssub.s32 %s16, %s23
      %p72 = scmp.eq.s32.totalorder %s71, 0
      %s74 = sadd.s32 %s73, 1
      %s75 = scalar_select %p72, %s73, %s74
      %p78 = pneg %p72
      %p79 = scmp.eq.s32.totalorder %s16, 1
      %p80 = por %p78, %p79
      %p81 = scmp.ne.s32.totalorder %s73, %s76
      %p82 = scmp.eq.s32.totalorder %s16, 0
      %p83 = por %p81, %p82
      %p84 = scmp.ne.s32.totalorder %s73, %s76
      %p85 = scmp.eq.s32.totalorder %s21, 1
      %p86 = por %p84, %p85
      %p87 = scmp.ne.s32.totalorder %s76, %s77
      %p88 = scmp.eq.s32.totalorder %s21, 0
      %p89 = por %p87, %p88
      %p90 = scmp.ne.s32.totalorder %s76, %s77
      %p91 = scmp.eq.s32.totalorder %s22, 1
      %p92 = por %p90, %p91
      %p94 = scmp.ne.s32.totalorder %s77, %s93
      %p95 = scmp.eq.s32.totalorder %s22, 0
      %p96 = por %p94, %p95
      %s97 = ssub.s32 %s16, %s23
      %p98 = scmp.eq.s32.totalorder %s97, 0
      %s100 = sadd.s32 %s99, 1
      %s101 = scalar_select %p98, %s99, %s100
      %p104 = pneg %p98
      %p105 = scmp.eq.s32.totalorder %s16, 1
      %p106 = por %p104, %p105
      %p107 = scmp.ne.s32.totalorder %s99, %s102
      %p108 = scmp.eq.s32.totalorder %s16, 0
      %p109 = por %p107, %p108
      %p110 = scmp.ne.s32.totalorder %s99, %s102
      %p111 = scmp.eq.s32.totalorder %s21, 1
      %p112 = por %p110, %p111
      %p113 = scmp.ne.s32.totalorder %s102, %s103
      %p114 = scmp.eq.s32.totalorder %s21, 0
      %p115 = por %p113, %p114
      %p116 = scmp.ne.s32.totalorder %s102, %s103
      %p117 = scmp.eq.s32.totalorder %s22, 1
      %p118 = por %p116, %p117
      %p120 = scmp.ne.s32.totalorder %s103, %s119
      %p121 = scmp.eq.s32.totalorder %s22, 0
      %p122 = por %p120, %p121
      %s124 = sadd.s32 %s123, 1
      %p127 = scmp.eq.s32.totalorder %s16, 1
      %p128 = scmp.ne.s32.totalorder %s123, %s125
      %p129 = scmp.eq.s32.totalorder %s16, 0
      %p130 = por %p128, %p129
      %p131 = scmp.ne.s32.totalorder %s123, %s125
      %p132 = scmp.eq.s32.totalorder %s21, 1
      %p133 = por %p131, %p132
      %p134 = scmp.ne.s32.totalorder %s125, %s126
      %p135 = scmp.eq.s32.totalorder %s21, 0
      %p136 = por %p134, %p135
      %p137 = scmp.ne.s32.totalorder %s125, %s126
      %p138 = scmp.eq.s32.totalorder %s22, 1
      %p139 = por %p137, %p138
      %p141 = scmp.ne.s32.totalorder %s126, %s140
      %p142 = scmp.eq.s32.totalorder %s22, 0
      %p143 = por %p141, %p142
      %s145 = sadd.s32 %s144, 1
      %p148 = scmp.eq.s32.totalorder %s16, 1
      %p149 = scmp.ne.s32.totalorder %s144, %s146
      %p150 = scmp.eq.s32.totalorder %s16, 0
      %p151 = por %p149, %p150
      %p152 = scmp.ne.s32.totalorder %s144, %s146
      %p153 = scmp.eq.s32.totalorder %s21, 1
      %p154 = por %p152, %p153
      %p155 = scmp.ne.s32.totalorder %s146, %s147
      %p156 = scmp.eq.s32.totalorder %s21, 0
      %p157 = por %p155, %p156
      %p158 = scmp.ne.s32.totalorder %s146, %s147
      %p159 = scmp.eq.s32.totalorder %s22, 1
      %p160 = por %p158, %p159
      %p162 = scmp.ne.s32.totalorder %s147, %s161
      %p163 = scmp.eq.s32.totalorder %s22, 0
      %p164 = por %p162, %p163
      %p165 = scmp.le.s32.totalorder 1, %s16
      %p166 = scmp.lt.s32.totalorder %s16, 3
      %p167 = pnand %p165, %p166
      %p168 = pneg %p167
      // Predicated region
      $region9: #{tpu_custom_call.1} parent=5 // pred_check
        _
      $region10: #{tpu_custom_call.1} parent=5 // pred_check_branch
        %170 = sbr.rel (%p167) target = $region12
      $region11: #{tpu_custom_call.1} parent=5 // pred_region
        %s171 = ssub.s32 %s16, 1
        // Predicated region
        $region13: #{tpu_custom_call.1} parent=11 // pred_check
          %p172 = pneg %p37
        $region14: #{tpu_custom_call.1} parent=11 // pred_check_branch
          %174 = sbr.rel (%p172) target = $region16
        $region15: #{tpu_custom_call.1} parent=11 // pred_region
          %s176 = ssub.s32 128, 128
          %177 = vsyncadd [#allocation3], %s176
          %s178 = sshll.u32 [#allocation2], 4
          %s179 = int_to_ptr.vmem [resolvable:$true] %s178
          %184 = dma.hbm_to_vmem [thread:$0]  %s0, 128, %s179, [#allocation3], 64, 64, 4
        $region16: #{tpu_custom_call.1} parent=11 // pred_fallthru
          _
        // Predicated region
        $region17: #{tpu_custom_call.1} parent=11 // pred_check
          %p185 = pneg %p136
        $region18: #{tpu_custom_call.1} parent=11 // pred_check_branch
          %187 = sbr.rel (%p185) target = $region20
        $region19: #{tpu_custom_call.1} parent=11 // pred_region
          _
        $region20: #{tpu_custom_call.1} parent=11 // pred_fallthru
          _
      $region12: #{tpu_custom_call.1} parent=5 // pred_fallthru
        _
      %p188 = scmp.lt.s32.totalorder %s16, 2
      // Predicated region
      $region21: #{tpu_custom_call.1} parent=5 // pred_check
        %p189 = pneg %p188
      $region22: #{tpu_custom_call.1} parent=5 // pred_check_branch
        %191 = sbr.rel (%p189) target = $region24
      $region23: #{tpu_custom_call.1} parent=5 // pred_region
        // Predicated region
        $region25: #{tpu_custom_call.1} parent=23 // pred_check
          %p192 = pneg %p57
        $region26: #{tpu_custom_call.1} parent=23 // pred_check_branch
          %194 = sbr.rel (%p192) target = $region28
        $region27: #{tpu_custom_call.1} parent=23 // pred_region
          %s195 = sand.u32 %s16, 1
          %s196 = scalar_lea.sflag [#allocation6], %s195
          %s197 = sand.u32 %s47, 1
          %s198 = smul.addr %s197, 64
          %s199 = scalar_lea.vmem [#allocation5], %s198
          %s201 = ssub.s32 1024, 1024
          %202 = vsyncadd %s196, %s201
          %s203 = smul.addr %s16, 64
          %s204 = scalar_lea.hbm %s1, %s203
          %s205 = sshll.u32 %s199, 4
          %s206 = int_to_ptr.vmem [resolvable:$true] %s205
          %211 = dma.hbm_to_vmem [thread:$0]  %s204, 1024, %s206, %s196, 128, 64, 4
        $region28: #{tpu_custom_call.1} parent=23 // pred_fallthru
          _
        // Predicated region
        $region29: #{tpu_custom_call.1} parent=23 // pred_check
          %p212 = pneg %p83
        $region30: #{tpu_custom_call.1} parent=23 // pred_check_branch
          %214 = sbr.rel (%p212) target = $region32
        $region31: #{tpu_custom_call.1} parent=23 // pred_region
          %p215 = scmp.lt.s32.totalorder %s16, 1
          %s216 = scalar_select %p215, %s16, 1
          %s217 = smul.addr %s216, 2
          %s218 = scalar_lea.vmem %s2, %s217
        $region32: #{tpu_custom_call.1} parent=23 // pred_fallthru
          _
        // Predicated region
        $region33: #{tpu_custom_call.1} parent=23 // pred_check
          %p219 = pneg %p109
        $region34: #{tpu_custom_call.1} parent=23 // pred_check_branch
          %221 = sbr.rel (%p219) target = $region36
        $region35: #{tpu_custom_call.1} parent=23 // pred_region
          %s222 = sand.u32 %s16, 1
          %s223 = scalar_lea.sflag [#allocation6], %s222
          %s224 = sand.u32 %s99, 1
          %s225 = smul.addr %s224, 64
          %s226 = scalar_lea.vmem [#allocation7], %s225
          %s227 = smul.u32 16, %s16
          %s229 = ssub.s32 1024, 1024
          %230 = vsyncadd %s223, %s229
          %s231 = smul.addr %s227, 64
          %s232 = scalar_lea.hbm %s3, %s231
          %s233 = sshll.u32 %s226, 4
          %s234 = int_to_ptr.vmem [resolvable:$true] %s233
          %239 = dma.hbm_to_vmem [thread:$0]  %s232, 1024, %s234, %s223, 64, 64, 4
        $region36: #{tpu_custom_call.1} parent=23 // pred_fallthru
          _
      $region24: #{tpu_custom_call.1} parent=5 // pred_fallthru
        _
      %p240 = scmp.le.s32.totalorder 1, %s16
      %p241 = scmp.lt.s32.totalorder %s16, 3
      %p242 = pnand %p240, %p241
      %p243 = pneg %p242
      // Predicated region
      $region37: #{tpu_custom_call.1} parent=5 // pred_check
        _
      $region38: #{tpu_custom_call.1} parent=5 // pred_check_branch
        %245 = sbr.rel (%p242) target = $region40
      $region39: #{tpu_custom_call.1} parent=5 // pred_region
        %s246 = ssub.s32 %s16, 1
        // Predicated region
        $region41: #{tpu_custom_call.1} parent=39 // pred_check
          %p247 = pneg %p37
        $region42: #{tpu_custom_call.1} parent=39 // pred_check_branch
          %249 = sbr.rel (%p247) target = $region44
        $region43: #{tpu_custom_call.1} parent=39 // pred_region
          %250 = dma.done [#allocation3], 128
        $region44: #{tpu_custom_call.1} parent=39 // pred_fallthru
          _
        %s251 = sand.u32 %s21, 1
        %s252 = scalar_lea.sflag [#allocation6], %s251
        %s253 = sand.u32 %s50, 1
        %s254 = smul.addr %s253, 64
        %s255 = scalar_lea.vmem [#allocation5], %s254
        // Predicated region
        $region45: #{tpu_custom_call.1} parent=39 // pred_check
          %p256 = pneg %p63
        $region46: #{tpu_custom_call.1} parent=39 // pred_check_branch
          %258 = sbr.rel (%p256) target = $region48
        $region47: #{tpu_custom_call.1} parent=39 // pred_region
          %259 = dma.done %s252, 1024
        $region48: #{tpu_custom_call.1} parent=39 // pred_fallthru
          _
        %s260 = sand.u32 %s21, 1
        %s261 = scalar_lea.sflag [#allocation6], %s260
        %s262 = sand.u32 %s102, 1
        %s263 = smul.addr %s262, 64
        %s264 = scalar_lea.vmem [#allocation7], %s263
        // Predicated region
        $region49: #{tpu_custom_call.1} parent=39 // pred_check
          %p265 = pneg %p115
        $region50: #{tpu_custom_call.1} parent=39 // pred_check_branch
          %267 = sbr.rel (%p265) target = $region52
        $region51: #{tpu_custom_call.1} parent=39 // pred_region
          %268 = dma.done %s261, 1024
        $region52: #{tpu_custom_call.1} parent=39 // pred_fallthru
          _
        %p269 = pneg %p37
        %p270 = pneg %p34
        %s271 = sand.u32 %s21, 1
        %s272 = scalar_lea.sflag [#allocation6], %s271
        %s273 = sand.u32 %s50, 1
        %s274 = smul.addr %s273, 64
        %s275 = scalar_lea.vmem [#allocation5], %s274
        %p276 = pneg %p63
        %p277 = pneg %p60
        %p278 = scmp.lt.s32.totalorder %s21, 1
        %s279 = scalar_select %p278, %s21, 1
        %s280 = smul.addr %s279, 2
        %s281 = scalar_lea.vmem %s2, %s280
        %p282 = pneg %p89
        %p283 = pneg %p86
        %s284 = sand.u32 %s21, 1
        %s285 = scalar_lea.sflag [#allocation6], %s284
        %s286 = sand.u32 %s102, 1
        %s287 = smul.addr %s286, 64
        %s288 = scalar_lea.vmem [#allocation7], %s287
        %p289 = pneg %p115
        %p290 = pneg %p112
        %p291 = pneg %p136
        %p292 = pneg %p133
        %p293 = pneg %p157
        %p294 = pneg %p154
        %p295 = scmp.lt.s32.totalorder %s21, 1
        %s296 = scalar_select %p295, %s21, 1
        %s297 = smul.addr %s296, 2
        %s298 = scalar_lea.vmem %s2, %s297
        %s299 = smul.u32 16, %s21
        %p301 = scmp.eq.s32.totalorder %s21, 0
        // Predicated region
        $region53: #{tpu_custom_call.1} parent=39 // pred_check
          %p302 = pneg %p301
        $region54: #{tpu_custom_call.1} parent=39 // pred_check_branch
          %304 = sbr.rel (%p302) target = $region56
        $region55: #{tpu_custom_call.1} parent=39 // pred_region
          %305 = vst [vmem:[#allocation8] sm:$0xff] 0.0
          %306 = vst [vmem:[#allocation8 + $0x8] sm:$0xff] 0.0
        $region56: #{tpu_custom_call.1} parent=39 // pred_fallthru
          _
        %v307 = vld [vmem:[#allocation2] sm:$0xf]
        %v308 = vld [vmem:[#allocation2 + $0x4] sm:$0xf]
        %v309 = vld [vmem:[%s255] sm:$0xf]
        %v310 = vld [vmem:[%s255 + $0x4] sm:$0xf]
        %v311 = vld [vmem:[%s255 + $0x8] sm:$0xf]
        %v312 = vld [vmem:[%s255 + $0xc] sm:$0xf]
        %v313 = vld [vmem:[%s255 + $0x10] sm:$0xf]
        %v314 = vld [vmem:[%s255 + $0x14] sm:$0xf]
        %v315 = vld [vmem:[%s255 + $0x18] sm:$0xf]
        %v316 = vld [vmem:[%s255 + $0x1c] sm:$0xf]
        %v317 = vld [vmem:[%s255 + $0x20] sm:$0xf]
        %v318 = vld [vmem:[%s255 + $0x24] sm:$0xf]
        %v319 = vld [vmem:[%s255 + $0x28] sm:$0xf]
        %v320 = vld [vmem:[%s255 + $0x2c] sm:$0xf]
        %v321 = vld [vmem:[%s255 + $0x30] sm:$0xf]
        %v322 = vld [vmem:[%s255 + $0x34] sm:$0xf]
        %v323 = vld [vmem:[%s255 + $0x38] sm:$0xf]
        %v324 = vld [vmem:[%s255 + $0x3c] sm:$0xf]
        %v327 = vunpack.c.l.b16 %v307
        %v328 = vunpack.c.l.b16 %v308
        %v329 = vpack.c.b16 %v328, %v327
        %v347 = vunpack.c.l.b16 %v309
        %v348 = vunpack.c.l.b16 %v310
        %v349 = vunpack.c.l.b16 %v311
        %v350 = vunpack.c.l.b16 %v312
        %v351 = vunpack.c.l.b16 %v313
        %v352 = vunpack.c.l.b16 %v314
        %v353 = vunpack.c.l.b16 %v315
        %v354 = vunpack.c.l.b16 %v316
        %v355 = vunpack.c.l.b16 %v317
        %v356 = vunpack.c.l.b16 %v318
        %v357 = vunpack.c.l.b16 %v319
        %v358 = vunpack.c.l.b16 %v320
        %v359 = vunpack.c.l.b16 %v321
        %v360 = vunpack.c.l.b16 %v322
        %v361 = vunpack.c.l.b16 %v323
        %v362 = vunpack.c.l.b16 %v324
        %v363 = vpack.c.b16 %v348, %v347
        %v364 = vpack.c.b16 %v350, %v349
        %v365 = vpack.c.b16 %v352, %v351
        %v366 = vpack.c.b16 %v354, %v353
        %v367 = vpack.c.b16 %v356, %v355
        %v368 = vpack.c.b16 %v358, %v357
        %v369 = vpack.c.b16 %v360, %v359
        %v370 = vpack.c.b16 %v362, %v361
        %379 = vmatprep.subr.bf16.mxu0 0
        %380 = vmatpush1.bf16.msra.mxu0 %v363
        %381 = vmatprep.subr.bf16.mxu0 0
        %382 = vmatpush1.bf16.msra.mxu0 %v364
        %383 = vmatprep.subr.bf16.mxu0 0
        %384 = vmatpush1.bf16.msra.mxu0 %v365
        %385 = vmatprep.subr.bf16.mxu0 0
        %386 = vmatpush1.bf16.msra.mxu0 %v366
        %387 = vmatprep.subr.bf16.mxu0 0
        %388 = vmatpush1.bf16.msra.mxu0 %v367
        %389 = vmatprep.subr.bf16.mxu0 0
        %390 = vmatpush1.bf16.msra.mxu0 %v368
        %391 = vmatprep.subr.bf16.mxu0 0
        %392 = vmatpush1.bf16.msra.mxu0 %v369
        %393 = vmatprep.subr.bf16.mxu0 0
        %394 = vmatpush1.bf16.msra.mxu0 %v370
        %395 = vmatprep.subr.bf16.mxu0 0
        %396 = vmatpush1.bf16.msra.mxu0 0
        %397 = vmatprep.subr.bf16.mxu0 0
        %398 = vmatpush1.bf16.msra.mxu0 0
        %399 = vmatprep.subr.bf16.mxu0 0
        %400 = vmatpush1.bf16.msra.mxu0 0
        %401 = vmatprep.subr.bf16.mxu0 0
        %402 = vmatpush1.bf16.msra.mxu0 0
        %403 = vmatprep.subr.bf16.mxu0 0
        %404 = vmatpush1.bf16.msra.mxu0 0
        %405 = vmatprep.subr.bf16.mxu0 0
        %406 = vmatpush1.bf16.msra.mxu0 0
        %407 = vmatprep.subr.bf16.mxu0 0
        %408 = vmatpush1.bf16.msra.mxu0 0
        %409 = vmatprep.subr.bf16.mxu0 0
        %410 = vmatpush1.bf16.msra.mxu0 0
        %411 = vmatprep.mubr.bf16.mxu0 0
        %412 = vmatmul.mubr.bf16.gmra.mrb[0].mxu0 %v329
        %v413 = vpop.f32.mrb[0].mxu0
        %v414 = vadd.f32 0.0, %v413
        %v415 = vpop.f32.mrb[0].mxu0
        %v416 = vpop.f32.mrb[0].mxu0
        %v417 = vadd.f32 0.0, %v416
        %v418 = vpop.f32.mrb[0].mxu0
        %419 = vdwg.mxu0
        %v420 = vadd.f32 %v414, %v417
        %v421 = vrot.slane %v420, 4
        %v422 = vadd.f32 %v420, %v421
        %v423 = vrot.slane %v422, 2
        %v424 = vadd.f32 %v422, %v423
        %v425 = vrot.slane %v424, 1
        %v426 = vadd.f32 %v424, %v425
        %v427 = vrcp.pop 16.0
        %v428 = vmul.f32 %v426, %v427
        %v429 = vsub.f32 %v414, %v428
        %v430 = vsub.f32 %v417, %v428
        %v431 = vmul.f32 %v429, %v429
        %v432 = vmul.f32 %v430, %v430
        %v433 = vadd.f32 %v431, %v432
        %v434 = vrot.slane %v433, 4
        %v435 = vadd.f32 %v433, %v434
        %v436 = vrot.slane %v435, 2
        %v437 = vadd.f32 %v435, %v436
        %v438 = vrot.slane %v437, 1
        %v439 = vadd.f32 %v437, %v438
        %v440 = vmul.f32 %v439, %v427
        %v441 = vld [vmem:[%s298] sm:$0x1]
        %v442 = vadd.f32 %v440, 1e-05
        %v443 = vrsqrt.pop %v442
        %v444 = vmul.f32 %v441, %v443
        %v445 = vlaneseq
        %v446 = vshrl.u32 %v445, 7
        %v447 = vsub.s32 0, %v446
        %v448 = vrot.slane %v444, %v447
        %v449 = vmul.f32 %v429, %v448
        %v450 = vmul.f32 %v430, %v448
        %v451 = vld [vmem:[%s298 + $0x1] sm:$0x1]
        %v452 = vlaneseq
        %v453 = vshrl.u32 %v452, 7
        %v454 = vsub.s32 0, %v453
        %v455 = vrot.slane %v451, %v454
        %v456 = vadd.f32 %v449, %v455
        %v457 = vadd.f32 %v450, %v455
        %v458 = vmax.f32 %v456, 0.0
        %v459 = vmax.f32 %v457, 0.0
        %v460 = vld [vmem:[#allocation8] sm:$0xff]
        %v461 = vld [vmem:[#allocation8 + $0x8] sm:$0xff]
        %v462 = vpack.c.bf16 %v459, %v458
        %v463 = vld [vmem:[%s264] sm:$0xf]
        %v464 = vld [vmem:[%s264 + $0x4] sm:$0xf]
        %v465 = vld [vmem:[%s264 + $0x8] sm:$0xf]
        %v466 = vld [vmem:[%s264 + $0xc] sm:$0xf]
        %v467 = vld [vmem:[%s264 + $0x10] sm:$0xf]
        %v468 = vld [vmem:[%s264 + $0x14] sm:$0xf]
        %v469 = vld [vmem:[%s264 + $0x18] sm:$0xf]
        %v470 = vld [vmem:[%s264 + $0x1c] sm:$0xf]
        %v471 = vld [vmem:[%s264 + $0x20] sm:$0xf]
        %v472 = vld [vmem:[%s264 + $0x24] sm:$0xf]
        %v473 = vld [vmem:[%s264 + $0x28] sm:$0xf]
        %v474 = vld [vmem:[%s264 + $0x2c] sm:$0xf]
        %v475 = vld [vmem:[%s264 + $0x30] sm:$0xf]
        %v476 = vld [vmem:[%s264 + $0x34] sm:$0xf]
        %v477 = vld [vmem:[%s264 + $0x38] sm:$0xf]
        %v478 = vld [vmem:[%s264 + $0x3c] sm:$0xf]
        %v495 = vunpack.c.l.b16 %v463
        %v496 = vunpack.c.l.b16 %v464
        %v497 = vunpack.c.l.b16 %v465
        %v498 = vunpack.c.l.b16 %v466
        %v499 = vunpack.c.l.b16 %v467
        %v500 = vunpack.c.l.b16 %v468
        %v501 = vunpack.c.l.b16 %v469
        %v502 = vunpack.c.l.b16 %v470
        %v503 = vunpack.c.l.b16 %v471
        %v504 = vunpack.c.l.b16 %v472
        %v505 = vunpack.c.l.b16 %v473
        %v506 = vunpack.c.l.b16 %v474
        %v507 = vunpack.c.l.b16 %v475
        %v508 = vunpack.c.l.b16 %v476
        %v509 = vunpack.c.l.b16 %v477
        %v510 = vunpack.c.l.b16 %v478
        %v511 = vpack.c.b16 %v496, %v495
        %v512 = vpack.c.b16 %v498, %v497
        %v513 = vpack.c.b16 %v500, %v499
        %v514 = vpack.c.b16 %v502, %v501
        %v515 = vpack.c.b16 %v504, %v503
        %v516 = vpack.c.b16 %v506, %v505
        %v517 = vpack.c.b16 %v508, %v507
        %v518 = vpack.c.b16 %v510, %v509
        %527 = vmatprep.subr.bf16.mxu0 0
        %528 = vmatpush1.bf16.msra.mxu0 %v511
        %529 = vmatprep.subr.bf16.mxu0 0
        %530 = vmatpush1.bf16.msra.mxu0 %v512
        %531 = vmatprep.subr.bf16.mxu0 0
        %532 = vmatpush1.bf16.msra.mxu0 %v513
        %533 = vmatprep.subr.bf16.mxu0 0
        %534 = vmatpush1.bf16.msra.mxu0 %v514
        %535 = vmatprep.subr.bf16.mxu0 0
        %536 = vmatpush1.bf16.msra.mxu0 %v515
        %537 = vmatprep.subr.bf16.mxu0 0
        %538 = vmatpush1.bf16.msra.mxu0 %v516
        %539 = vmatprep.subr.bf16.mxu0 0
        %540 = vmatpush1.bf16.msra.mxu0 %v517
        %541 = vmatprep.subr.bf16.mxu0 0
        %542 = vmatpush1.bf16.msra.mxu0 %v518
        %543 = vmatprep.subr.bf16.mxu0 0
        %544 = vmatpush1.bf16.msra.mxu0 0
        %545 = vmatprep.subr.bf16.mxu0 0
        %546 = vmatpush1.bf16.msra.mxu0 0
        %547 = vmatprep.subr.bf16.mxu0 0
        %548 = vmatpush1.bf16.msra.mxu0 0
        %549 = vmatprep.subr.bf16.mxu0 0
        %550 = vmatpush1.bf16.msra.mxu0 0
        %551 = vmatprep.subr.bf16.mxu0 0
        %552 = vmatpush1.bf16.msra.mxu0 0
        %553 = vmatprep.subr.bf16.mxu0 0
        %554 = vmatpush1.bf16.msra.mxu0 0
        %555 = vmatprep.subr.bf16.mxu0 0
        %556 = vmatpush1.bf16.msra.mxu0 0
        %557 = vmatprep.subr.bf16.mxu0 0
        %558 = vmatpush1.bf16.msra.mxu0 0
        %559 = vmatprep.mubr.bf16.mxu0 0
        %560 = vmatmul.mubr.bf16.gmra.mrb[0].mxu0 %v462
        %v561 = vpop.f32.mrb[0].mxu0
        %v562 = vadd.f32 0.0, %v561
        %v563 = vpop.f32.mrb[0].mxu0
        %v564 = vpop.f32.mrb[0].mxu0
        %v565 = vadd.f32 0.0, %v564
        %v566 = vpop.f32.mrb[0].mxu0
        %567 = vdwg.mxu0
        %v568 = vadd.f32 %v460, %v562
        %v569 = vadd.f32 %v461, %v565
        %570 = vst [vmem:[#allocation8] sm:$0xff] %v568
        %571 = vst [vmem:[#allocation8 + $0x8] sm:$0xff] %v569
        %p572 = scmp.eq.s32.totalorder %s21, 1
        // Predicated region
        $region57: #{tpu_custom_call.1} parent=39 // pred_check
          %p573 = pneg %p572
        $region58: #{tpu_custom_call.1} parent=39 // pred_check_branch
          %575 = sbr.rel (%p573) target = $region60
        $region59: #{tpu_custom_call.1} parent=39 // pred_region
          %v576 = vld [vmem:[#allocation8] sm:$0xff]
          %v577 = vld [vmem:[#allocation8 + $0x8] sm:$0xff]
          %v578 = vld [vmem:[%s4] sm:$0x1]
          %v580 = vlaneseq
          %v581 = vshrl.u32 %v580, 7
          %v582 = vsub.s32 0, %v581
          %v583 = vrot.slane %v578, %v582
          %v585 = vadd.f32 %v576, %v583
          %v586 = vadd.f32 %v577, %v583
          %587 = vst [vmem:[#allocation8] sm:$0xff] %v585
          %588 = vst [vmem:[#allocation8 + $0x8] sm:$0xff] %v586
        $region60: #{tpu_custom_call.1} parent=39 // pred_fallthru
          _
        // Predicated region
        $region61: #{tpu_custom_call.1} parent=39 // pred_check
          %p589 = pneg %p154
        $region62: #{tpu_custom_call.1} parent=39 // pred_check_branch
          %591 = sbr.rel (%p589) target = $region64
        $region63: #{tpu_custom_call.1} parent=39 // pred_region
          %s593 = ssub.s32 256, 256
          %594 = vsyncadd [#allocation4], %s593
          %s595 = sshll.u32 [#allocation8], 4
          %s596 = int_to_ptr.vmem [resolvable:$true] %s595
          %601 = dma.vmem_to_hbm [thread:$0]  %s596, 256, %s5, [#allocation4], 128, 128, 8
        $region64: #{tpu_custom_call.1} parent=39 // pred_fallthru
          _
        // Predicated region
        $region65: #{tpu_custom_call.1} parent=39 // pred_check
          %p602 = pneg %p154
        $region66: #{tpu_custom_call.1} parent=39 // pred_check_branch
          %604 = sbr.rel (%p602) target = $region68
        $region67: #{tpu_custom_call.1} parent=39 // pred_region
          %605 = dma.done [#allocation4], 256
        $region68: #{tpu_custom_call.1} parent=39 // pred_fallthru
          _
      $region40: #{tpu_custom_call.1} parent=5 // pred_fallthru
        _
      %p606 = scmp.le.s32.totalorder 2, %s16
      // Predicated region
      $region69: #{tpu_custom_call.1} parent=5 // pred_check
        %p607 = pneg %p606
      $region70: #{tpu_custom_call.1} parent=5 // pred_check_branch
        %609 = sbr.rel (%p607) target = $region72
      $region71: #{tpu_custom_call.1} parent=5 // pred_region
        %s610 = ssub.s32 %s16, 2
      $region72: #{tpu_custom_call.1} parent=5 // pred_fallthru
        _
    $region6: #{tpu_custom_call.1} parent=1 // loop_footer
      %s20 = sadd.s32 1, %s16
    $region7: #{tpu_custom_call.1} parent=1 // loop_footer_branch
      %15 = sbr.rel target = $region3
    $region8: #{tpu_custom_call.1} parent=1 // loop_exit
      _
    %611 = vsyncpa [#allocation3], 1
    %s612 = scalar_lea.sflag [#allocation3], 1
    %613 = vsyncpa %s612, 1
    %614 = vsyncpa [#allocation6], 1
    %s615 = scalar_lea.sflag [#allocation6], 1
    %616 = vsyncpa %s615, 1
    %617 = vsyncpa [#allocation4], 1
    %s618 = scalar_lea.sflag [#allocation4], 1
    %619 = vsyncpa %s618, 1

</llo_original>
